<compile_context>
chip_gen: v7x
topology: tpu7x:2x2x1
jax: 0.10.0
libtpu: 0.0.40
codegen_flags: <defaults>
</compile_context>

<pallas_src>
import functools
import math

import jax
import jax.numpy as jnp
from jax.experimental import pallas as pl
from jax.experimental.pallas import tpu as pltpu

LN_EPS = 1e-5    # torch.nn.LayerNorm default
VAR_EPS = 1e-4   # CustomVAEDecoder.var_eps
LANE = 128
ROW_PACK = 16    # bf16 packs 16 rows per vreg


def _round_up(n, m):
    return ((n + m - 1) // m) * m


def _pad2d(a, rows, cols):
    r, c = a.shape
    return jnp.pad(a, ((0, rows - r), (0, cols - c)))


def _ln_relu(y, d_true):
    """LayerNorm(elementwise_affine=False) -> ReLU on a zero-padded f32 tile.

    Padded lanes of `y` are exactly zero (padded weight columns and bias are
    zero), so lane sums over the padded width equal sums over the true width;
    no masking is needed, statistics just divide by d_true.  var is computed as
    E[y^2] - mean^2 so the two lane reductions are independent (shorter XLU
    critical path); fine at the verification tolerance.
    """
    inv_d = 1.0 / d_true
    mean = jnp.sum(y, axis=-1, keepdims=True) * inv_d
    mean_sq = jnp.sum(y * y, axis=-1, keepdims=True) * inv_d
    var = mean_sq - mean * mean
    return jnp.maximum((y - mean) * jax.lax.rsqrt(var + LN_EPS), 0.0)


def _vae_decoder_kernel(num_blocks, d_lat, d_hid, d_lat_p, temperature,
                        x_ref, eps_ref, w_enc_ref, b_enc_ref, w_d0_ref, b_d0_ref,
                        res_w_ref, res_b_ref, w_fin_ref, b_fin_ref,
                        out_ref, lat_ref, mu_ref, std_ref):
    # --- fused mu/var encoders: one 2*d_lat_p-wide MXU pass, then split ---
    y_enc = jnp.dot(x_ref[...], w_enc_ref[...],
                    preferred_element_type=jnp.float32) + b_enc_ref[...]
    mu = _ln_relu(y_enc[:, :d_lat_p], d_lat)
    var_pre = _ln_relu(y_enc[:, d_lat_p:], d_lat)
    var = jnp.exp(var_pre) + VAR_EPS
    std = temperature * jnp.sqrt(var)

    # --- reparameterized sample: Normal(mu, std).rsample() ---
    latents = mu + std * eps_ref[...]          # bf16 noise * f32 -> f32

    # --- decoder: initial layer, residual blocks, final linear ---
    # TODO(synk): training-mode dropout would use pltpu.prng_seed/prng_random_bits;
    # eval mode => identity.
    h = _ln_relu(jnp.dot(latents.astype(jnp.bfloat16), w_d0_ref[...],
                         preferred_element_type=jnp.float32) + b_d0_ref[...], d_hid)

    def block(k, h):
        y = jnp.dot(h.astype(jnp.bfloat16), res_w_ref[k],
                    preferred_element_type=jnp.float32) + res_b_ref[k]
        return _ln_relu(y, d_hid)

    if num_blocks <= 4:
        for k in range(num_blocks):            # unrolled for small depth
            h = block(k, h)
    else:
        h = jax.lax.fori_loop(0, num_blocks, block, h)

    out = jnp.dot(h.astype(jnp.bfloat16), w_fin_ref[...],
                  preferred_element_type=jnp.float32) + b_fin_ref[...]

    out_ref[...] = out.astype(out_ref.dtype)
    lat_ref[...] = latents.astype(lat_ref.dtype)
    mu_ref[...] = mu.astype(mu_ref.dtype)
    std_ref[...] = std.astype(std_ref.dtype)


def custom_vae_decoder_forward(x, eps, w_mu, b_mu, w_var, b_var, w_dec0, b_dec0,
                               res_params, w_fin, b_fin, *, temperature=1.0,
                               tile_b_max=None):
    """Fused forward of CustomVAEDecoder.

    x:   [B, input_dim], eps: [B, vae_latent_dim] standard-normal noise.
    weights: [in, out], biases: [out]; res_params: list of (w, b).
    Returns (outputs[B, output_dim], latents[B, L], (mu[B, L], std[B, L])).
    """
    B, d_in = x.shape
    d_lat = w_mu.shape[1]
    d_hid = w_dec0.shape[1]
    d_out = w_fin.shape[1]
    num_blocks = len(res_params)
    assert num_blocks >= 1, "CustomDecoder expects at least one residual block"

    d_in_p = _round_up(d_in, LANE)
    d_lat_p = _round_up(d_lat, LANE)
    d_hid_p = _round_up(d_hid, LANE)
    d_out_p = _round_up(d_out, LANE)

    # Physical VMEM drives the batch-tile cap and the requested vmem limit.
    try:
        vmem_cap = int(pltpu.get_tpu_info().vmem_capacity_bytes)
    except Exception:
        vmem_cap = 64 * 1024 * 1024  # conservative (v7x-sized) fallback

    if tile_b_max is None:
        # v7x (64 MiB VMEM/TC): cap at 256; v5e/v6e (128 MiB): larger tiles
        # amortize the ~0.35 us/step pipeline overhead.
        tile_b_max = 256 if vmem_cap <= 80 * 1024 * 1024 else 512

    # >= 2 grid steps when B allows (batch axis is "parallel" => both v7x TCs
    # get work); rows rounded to 16 so bf16 MXU operands stay vreg-packed.
    tile_b = max(ROW_PACK, min(_round_up(pl.cdiv(B, 2), ROW_PACK), tile_b_max))
    b_pad = _round_up(B, tile_b)

    # bf16 inputs (they are only consumed as MXU / FMA operands).
    x_p = _pad2d(x.astype(jnp.float32), b_pad, d_in_p).astype(jnp.bfloat16)
    eps_p = _pad2d(eps.astype(jnp.float32), b_pad, d_lat_p).astype(jnp.bfloat16)

    def pad_w(w, rp, cp):
        return _pad2d(w.astype(jnp.float32), rp, cp).astype(jnp.bfloat16)

    def pad_b(b, cp):
        return _pad2d(b.astype(jnp.float32).reshape(1, -1), 1, cp)

    # Fused mu|var encoder weight: [d_in_p, 2*d_lat_p].
    w_enc = jnp.concatenate([pad_w(w_mu, d_in_p, d_lat_p),
                             pad_w(w_var, d_in_p, d_lat_p)], axis=1)
    b_enc = jnp.concatenate([pad_b(b_mu, d_lat_p), pad_b(b_var, d_lat_p)], axis=1)
    w_d0 = pad_w(w_dec0, d_lat_p, d_hid_p)
    b_d0 = pad_b(b_dec0, d_hid_p)
    res_w = jnp.stack([pad_w(w, d_hid_p, d_hid_p) for (w, _) in res_params])
    res_b = jnp.stack([pad_b(b, d_hid_p) for (_, b) in res_params])
    w_fin_p = pad_w(w_fin, d_hid_p, d_out_p)
    b_fin_p = pad_b(b_fin, d_out_p)

    inputs = [x_p, eps_p, w_enc, b_enc, w_d0, b_d0, res_w, res_b, w_fin_p, b_fin_p]

    out_shape = (
        jax.ShapeDtypeStruct((b_pad, d_out_p), jnp.float32),    # outputs
        jax.ShapeDtypeStruct((b_pad, d_lat_p), jnp.bfloat16),   # latents
        jax.ShapeDtypeStruct((b_pad, d_lat_p), jnp.bfloat16),   # mu
        jax.ShapeDtypeStruct((b_pad, d_lat_p), jnp.bfloat16),   # std
    )

    # VMEM budget: resident weights (bf16) + double-buffered I/O tiles +
    # activation headroom + slack; request that, clear of the physical cap.
    weight_bytes = sum(int(a.size) * a.dtype.itemsize for a in inputs[2:])
    io_bytes = 2 * tile_b * (2 * d_in_p + 2 * d_lat_p)            # bf16 in, x2 buf
    out_bytes = 2 * tile_b * (4 * d_out_p + 3 * 2 * d_lat_p)      # x2 buf
    act_bytes = 6 * tile_b * 4 * max(2 * d_lat_p, d_hid_p, d_out_p)
    needed = 2 * weight_bytes + io_bytes + out_bytes + act_bytes + (4 << 20)
    vmem_limit = int(min(max(needed, 32 << 20), vmem_cap - (8 << 20)))

    flops = 2 * b_pad * (2 * d_in_p * d_lat_p + d_lat_p * d_hid_p
                         + num_blocks * d_hid_p * d_hid_p + d_hid_p * d_out_p)
    transcendentals = b_pad * (2 * d_lat_p + (3 + num_blocks))
    bytes_accessed = (sum(int(a.size) * a.dtype.itemsize for a in inputs)
                      + sum(math.prod(s.shape) * jnp.dtype(s.dtype).itemsize
                            for s in out_shape))

    kernel = functools.partial(_vae_decoder_kernel, num_blocks, d_lat, d_hid,
                               d_lat_p, float(temperature))

    def batch_spec(cols):
        return pl.BlockSpec((tile_b, cols), lambda i: (i, 0))

    def build_call(single_buffer_weights):
        def full_spec(shape):
            nd = len(shape)
            idx_map = lambda *_: (0,) * nd
            if single_buffer_weights:
                # Constant index_map: double-buffering buys nothing, so keep
                # one resident copy and halve the weight VMEM footprint.
                return pl.BlockSpec(shape, idx_map, pipeline_mode=pl.Buffered(1))
            return pl.BlockSpec(shape, idx_map)

        in_specs = [batch_spec(d_in_p), batch_spec(d_lat_p)]
        in_specs += [full_spec(a.shape) for a in inputs[2:]]
        out_specs = (batch_spec(d_out_p), batch_spec(d_lat_p),
                     batch_spec(d_lat_p), batch_spec(d_lat_p))

        return pl.pallas_call(
            kernel,
            out_shape=out_shape,
            grid_spec=pltpu.PrefetchScalarGridSpec(
                num_scalar_prefetch=0,
                grid=(b_pad // tile_b,),
                in_specs=in_specs,
                out_specs=out_specs,
            ),
            compiler_params=pltpu.CompilerParams(
                dimension_semantics=("parallel",),
                vmem_limit_bytes=vmem_limit,
            ),
            cost_estimate=pl.CostEstimate(
                flops=flops,
                transcendentals=transcendentals,
                bytes_accessed=bytes_accessed,
            ),
        )

    try:
        outs = build_call(True)(*inputs)
    except Exception:
        # Fallback if this JAX build rejects single-buffered resident BlockSpecs.
        outs = build_call(False)(*inputs)

    outputs_p, latents_p, mu_p, std_p = outs
    outputs = outputs_p[:B, :d_out]
    latents = latents_p[:B, :d_lat].astype(jnp.float32)
    mu = mu_p[:B, :d_lat].astype(jnp.float32)
    std = std_p[:B, :d_lat].astype(jnp.float32)
    return outputs, latents, (mu, std)


# ----------------------------- pure-JAX reference -----------------------------
def _ref_block(x, w, b):
    y = jnp.dot(x.astype(jnp.bfloat16), w.astype(jnp.bfloat16),
                preferred_element_type=jnp.float32) + b
    mean = jnp.mean(y, axis=-1, keepdims=True)
    var = jnp.mean((y - mean) ** 2, axis=-1, keepdims=True)
    y = (y - mean) * jax.lax.rsqrt(var + LN_EPS)
    return jnp.maximum(y, 0.0)


def reference_forward(x, eps, w_mu, b_mu, w_var, b_var, w_d0, b_d0, res_params,
                      w_fin, b_fin, temperature=1.0):
    mu = _ref_block(x, w_mu, b_mu)
    var = jnp.exp(_ref_block(x, w_var, b_var)) + VAR_EPS
    std = temperature * jnp.sqrt(var)
    latents = mu + std * eps
    h = _ref_block(latents, w_d0, b_d0)
    for (w, b) in res_params:
        h = _ref_block(h, w, b)
    outputs = jnp.dot(h.astype(jnp.bfloat16), w_fin.astype(jnp.bfloat16),
                      preferred_element_type=jnp.float32) + b_fin
    return outputs, latents, (mu, std)


if __name__ == "__main__":
    key = jax.random.PRNGKey(0)
    keys = jax.random.split(key, 16)

    batch = 16
    input_dim, vae_latent_dim, decoder_hidden_dim, output_dim = 64, 16, 32, 48
    num_blocks = 1

    x = jax.random.normal(keys[0], (batch, input_dim), dtype=jnp.float32)
    eps = jax.random.normal(keys[1], (batch, vae_latent_dim), dtype=jnp.float32)

    def init_linear(kw, kb, din, dout):
        bound = 1.0 / jnp.sqrt(din)
        w = jax.random.uniform(kw, (din, dout), minval=-bound, maxval=bound,
                               dtype=jnp.float32)
        b = jax.random.uniform(kb, (dout,), minval=-bound, maxval=bound,
                               dtype=jnp.float32)
        return w, b

    w_mu, b_mu = init_linear(keys[2], keys[3], input_dim, vae_latent_dim)
    w_var, b_var = init_linear(keys[4], keys[5], input_dim, vae_latent_dim)
    w_d0, b_d0 = init_linear(keys[6], keys[7], vae_latent_dim, decoder_hidden_dim)
    res_params = []
    for k in range(num_blocks):
        w, b = init_linear(keys[8 + 2 * k], keys[9 + 2 * k],
                           decoder_hidden_dim, decoder_hidden_dim)
        res_params.append((w, b))
    w_fin, b_fin = init_linear(keys[8 + 2 * num_blocks], keys[9 + 2 * num_blocks],
                               decoder_hidden_dim, output_dim)

    outputs, latents, (mu, std) = custom_vae_decoder_forward(
        x, eps, w_mu, b_mu, w_var, b_var, w_d0, b_d0, res_params, w_fin, b_fin,
        temperature=1.0)
    outputs = jax.block_until_ready(outputs)

    r_out, r_lat, (r_mu, r_std) = reference_forward(
        x, eps, w_mu, b_mu, w_var, b_var, w_d0, b_d0, res_params, w_fin, b_fin, 1.0)

    assert outputs.shape == (batch, output_dim)
    assert latents.shape == (batch, vae_latent_dim)
    assert mu.shape == (batch, vae_latent_dim) and std.shape == (batch, vae_latent_dim)
    assert jnp.allclose(outputs, r_out, atol=2e-2, rtol=2e-2)
    assert jnp.allclose(latents, r_lat, atol=2e-2, rtol=2e-2)
    assert jnp.allclose(mu, r_mu, atol=2e-2, rtol=2e-2)
    assert jnp.allclose(std, r_std, atol=2e-2, rtol=2e-2)

    print("KERNEL_OK")
</pallas_src>

<mosaic_0001>
module attributes {stable_mosaic.version = 11 : i64} {
  func.func @_vae_decoder_kernel(%arg0: i32, %arg1: memref<16x128xbf16, #tpu.memory_space<vmem>>, %arg2: memref<16x128xbf16, #tpu.memory_space<vmem>>, %arg3: memref<128x256xbf16, #tpu.memory_space<vmem>>, %arg4: memref<1x256xf32, #tpu.memory_space<vmem>>, %arg5: memref<128x128xbf16, #tpu.memory_space<vmem>>, %arg6: memref<1x128xf32, #tpu.memory_space<vmem>>, %arg7: memref<1x128x128xbf16, #tpu.memory_space<vmem>>, %arg8: memref<1x1x128xf32, #tpu.memory_space<vmem>>, %arg9: memref<128x128xbf16, #tpu.memory_space<vmem>>, %arg10: memref<1x128xf32, #tpu.memory_space<vmem>>, %arg11: memref<16x128xf32, #tpu.memory_space<vmem>>, %arg12: memref<16x128xbf16, #tpu.memory_space<vmem>>, %arg13: memref<16x128xbf16, #tpu.memory_space<vmem>>, %arg14: memref<16x128xbf16, #tpu.memory_space<vmem>>) attributes {dimension_semantics = [#tpu.dimension_semantics<parallel>], iteration_bounds = array<i64: 1>, scalar_prefetch = 0 : i64, scratch_operands = 0 : i64, tpu.core_type = #tpu.core_type<tc>, window_params = [{transform_indices = @transform_0, window_bounds = array<i64: 16, 128>}, {transform_indices = @transform_1, window_bounds = array<i64: 16, 128>}, {pipeline_mode = #tpu.pipeline_mode<synchronous>, transform_indices = @transform_2, window_bounds = array<i64: 128, 256>}, {pipeline_mode = #tpu.pipeline_mode<synchronous>, transform_indices = @transform_3, window_bounds = array<i64: 1, 256>}, {pipeline_mode = #tpu.pipeline_mode<synchronous>, transform_indices = @transform_4, window_bounds = array<i64: 128, 128>}, {pipeline_mode = #tpu.pipeline_mode<synchronous>, transform_indices = @transform_5, window_bounds = array<i64: 1, 128>}, {pipeline_mode = #tpu.pipeline_mode<synchronous>, transform_indices = @transform_6, window_bounds = array<i64: 1, 128, 128>}, {pipeline_mode = #tpu.pipeline_mode<synchronous>, transform_indices = @transform_7, window_bounds = array<i64: 1, 1, 128>}, {pipeline_mode = #tpu.pipeline_mode<synchronous>, transform_indices = @transform_8, window_bounds = array<i64: 128, 128>}, {pipeline_mode = #tpu.pipeline_mode<synchronous>, transform_indices = @transform_9, window_bounds = array<i64: 1, 128>}, {transform_indices = @transform_10, window_bounds = array<i64: 16, 128>}, {transform_indices = @transform_11, window_bounds = array<i64: 16, 128>}, {transform_indices = @transform_12, window_bounds = array<i64: 16, 128>}, {transform_indices = @transform_13, window_bounds = array<i64: 16, 128>}]} {
    %c0 = arith.constant 0 : index
    %c0_0 = arith.constant 0 : index
    %0 = vector.load %arg1[%c0, %c0_0] : memref<16x128xbf16, #tpu.memory_space<vmem>>, vector<16x128xbf16>
    %c0_1 = arith.constant 0 : index
    %c0_2 = arith.constant 0 : index
    %1 = vector.load %arg3[%c0_1, %c0_2] : memref<128x256xbf16, #tpu.memory_space<vmem>>, vector<128x256xbf16>
    %cst = arith.constant dense<0.000000e+00> : vector<16x256xf32>
    %2 = tpu.matmul %0, %1, %cst {dimension_numbers = #tpu.dot_dimension_numbers<[1], [0], [0], [1], [0, 0, 1, 1], [], []>} : vector<16x128xbf16>, vector<128x256xbf16>, vector<16x256xf32> -> vector<16x256xf32>
    %c0_3 = arith.constant 0 : index
    %c0_4 = arith.constant 0 : index
    %3 = vector.load %arg4[%c0_3, %c0_4] : memref<1x256xf32, #tpu.memory_space<vmem>>, vector<1x256xf32>
    %4 = vector.broadcast %3 : vector<1x256xf32> to vector<16x256xf32>
    %5 = arith.addf %2, %4 : vector<16x256xf32>
    %6 = vector.extract_strided_slice %5 {offsets = [0, 0], sizes = [16, 128], strides = [1, 1]} : vector<16x256xf32> to vector<16x128xf32>
    %cst_5 = arith.constant dense<0.000000e+00> : vector<16xf32>
    %7 = vector.multi_reduction <add>, %6, %cst_5 [1] : vector<16x128xf32> to vector<16xf32>
    %8 = vector.shape_cast %7 : vector<16xf32> to vector<16x1xf32>
    %cst_6 = arith.constant 6.250000e-02 : f32
    %9 = vector.broadcast %cst_6 : f32 to vector<16x1xf32>
    %10 = arith.mulf %8, %9 : vector<16x1xf32>
    %11 = arith.mulf %6, %6 : vector<16x128xf32>
    %cst_7 = arith.constant dense<0.000000e+00> : vector<16xf32>
    %12 = vector.multi_reduction <add>, %11, %cst_7 [1] : vector<16x128xf32> to vector<16xf32>
    %13 = vector.shape_cast %12 : vector<16xf32> to vector<16x1xf32>
    %cst_8 = arith.constant 6.250000e-02 : f32
    %14 = vector.broadcast %cst_8 : f32 to vector<16x1xf32>
    %15 = arith.mulf %13, %14 : vector<16x1xf32>
    %16 = arith.mulf %10, %10 : vector<16x1xf32>
    %17 = arith.subf %15, %16 : vector<16x1xf32>
    %18 = vector.broadcast %10 : vector<16x1xf32> to vector<16x128xf32>
    %19 = arith.subf %6, %18 : vector<16x128xf32>
    %cst_9 = arith.constant 9.99999974E-6 : f32
    %20 = vector.broadcast %cst_9 : f32 to vector<16x1xf32>
    %21 = arith.addf %17, %20 : vector<16x1xf32>
    %22 = math.rsqrt %21 : vector<16x1xf32>
    %23 = vector.broadcast %22 : vector<16x1xf32> to vector<16x128xf32>
    %24 = arith.mulf %19, %23 : vector<16x128xf32>
    %cst_10 = arith.constant 0.000000e+00 : f32
    %25 = vector.broadcast %cst_10 : f32 to vector<16x128xf32>
    %26 = arith.maximumf %24, %25 : vector<16x128xf32>
    %27 = vector.extract_strided_slice %5 {offsets = [0, 128], sizes = [16, 128], strides = [1, 1]} : vector<16x256xf32> to vector<16x128xf32>
    %cst_11 = arith.constant dense<0.000000e+00> : vector<16xf32>
    %28 = vector.multi_reduction <add>, %27, %cst_11 [1] : vector<16x128xf32> to vector<16xf32>
    %29 = vector.shape_cast %28 : vector<16xf32> to vector<16x1xf32>
    %cst_12 = arith.constant 6.250000e-02 : f32
    %30 = vector.broadcast %cst_12 : f32 to vector<16x1xf32>
    %31 = arith.mulf %29, %30 : vector<16x1xf32>
    %32 = arith.mulf %27, %27 : vector<16x128xf32>
    %cst_13 = arith.constant dense<0.000000e+00> : vector<16xf32>
    %33 = vector.multi_reduction <add>, %32, %cst_13 [1] : vector<16x128xf32> to vector<16xf32>
    %34 = vector.shape_cast %33 : vector<16xf32> to vector<16x1xf32>
    %cst_14 = arith.constant 6.250000e-02 : f32
    %35 = vector.broadcast %cst_14 : f32 to vector<16x1xf32>
    %36 = arith.mulf %34, %35 : vector<16x1xf32>
    %37 = arith.mulf %31, %31 : vector<16x1xf32>
    %38 = arith.subf %36, %37 : vector<16x1xf32>
    %39 = vector.broadcast %31 : vector<16x1xf32> to vector<16x128xf32>
    %40 = arith.subf %27, %39 : vector<16x128xf32>
    %cst_15 = arith.constant 9.99999974E-6 : f32
    %41 = vector.broadcast %cst_15 : f32 to vector<16x1xf32>
    %42 = arith.addf %38, %41 : vector<16x1xf32>
    %43 = math.rsqrt %42 : vector<16x1xf32>
    %44 = vector.broadcast %43 : vector<16x1xf32> to vector<16x128xf32>
    %45 = arith.mulf %40, %44 : vector<16x128xf32>
    %cst_16 = arith.constant 0.000000e+00 : f32
    %46 = vector.broadcast %cst_16 : f32 to vector<16x128xf32>
    %47 = arith.maximumf %45, %46 : vector<16x128xf32>
    %48 = math.exp %47 : vector<16x128xf32>
    %cst_17 = arith.constant 9.99999974E-5 : f32
    %49 = vector.broadcast %cst_17 : f32 to vector<16x128xf32>
    %50 = arith.addf %48, %49 : vector<16x128xf32>
    %51 = math.sqrt %50 : vector<16x128xf32>
    %cst_18 = arith.constant 1.000000e+00 : f32
    %52 = vector.broadcast %cst_18 : f32 to vector<16x128xf32>
    %53 = arith.mulf %52, %51 : vector<16x128xf32>
    %c0_19 = arith.constant 0 : index
    %c0_20 = arith.constant 0 : index
    %54 = vector.load %arg2[%c0_19, %c0_20] : memref<16x128xbf16, #tpu.memory_space<vmem>>, vector<16x128xbf16>
    %55 = arith.extf %54 : vector<16x128xbf16> to vector<16x128xf32>
    %56 = arith.mulf %53, %55 : vector<16x128xf32>
    %57 = arith.addf %26, %56 : vector<16x128xf32>
    %58 = arith.truncf %57 : vector<16x128xf32> to vector<16x128xbf16>
    %c0_21 = arith.constant 0 : index
    %c0_22 = arith.constant 0 : index
    %59 = vector.load %arg5[%c0_21, %c0_22] : memref<128x128xbf16, #tpu.memory_space<vmem>>, vector<128x128xbf16>
    %cst_23 = arith.constant dense<0.000000e+00> : vector<16x128xf32>
    %60 = tpu.matmul %58, %59, %cst_23 {dimension_numbers = #tpu.dot_dimension_numbers<[1], [0], [0], [1], [0, 0, 1, 1], [], []>} : vector<16x128xbf16>, vector<128x128xbf16>, vector<16x128xf32> -> vector<16x128xf32>
    %c0_24 = arith.constant 0 : index
    %c0_25 = arith.constant 0 : index
    %61 = vector.load %arg6[%c0_24, %c0_25] : memref<1x128xf32, #tpu.memory_space<vmem>>, vector<1x128xf32>
    %62 = vector.broadcast %61 : vector<1x128xf32> to vector<16x128xf32>
    %63 = arith.addf %60, %62 : vector<16x128xf32>
    %cst_26 = arith.constant dense<0.000000e+00> : vector<16xf32>
    %64 = vector.multi_reduction <add>, %63, %cst_26 [1] : vector<16x128xf32> to vector<16xf32>
    %65 = vector.shape_cast %64 : vector<16xf32> to vector<16x1xf32>
    %cst_27 = arith.constant 3.125000e-02 : f32
    %66 = vector.broadcast %cst_27 : f32 to vector<16x1xf32>
    %67 = arith.mulf %65, %66 : vector<16x1xf32>
    %68 = arith.mulf %63, %63 : vector<16x128xf32>
    %cst_28 = arith.constant dense<0.000000e+00> : vector<16xf32>
    %69 = vector.multi_reduction <add>, %68, %cst_28 [1] : vector<16x128xf32> to vector<16xf32>
    %70 = vector.shape_cast %69 : vector<16xf32> to vector<16x1xf32>
    %cst_29 = arith.constant 3.125000e-02 : f32
    %71 = vector.broadcast %cst_29 : f32 to vector<16x1xf32>
    %72 = arith.mulf %70, %71 : vector<16x1xf32>
    %73 = arith.mulf %67, %67 : vector<16x1xf32>
    %74 = arith.subf %72, %73 : vector<16x1xf32>
    %75 = vector.broadcast %67 : vector<16x1xf32> to vector<16x128xf32>
    %76 = arith.subf %63, %75 : vector<16x128xf32>
    %cst_30 = arith.constant 9.99999974E-6 : f32
    %77 = vector.broadcast %cst_30 : f32 to vector<16x1xf32>
    %78 = arith.addf %74, %77 : vector<16x1xf32>
    %79 = math.rsqrt %78 : vector<16x1xf32>
    %80 = vector.broadcast %79 : vector<16x1xf32> to vector<16x128xf32>
    %81 = arith.mulf %76, %80 : vector<16x128xf32>
    %cst_31 = arith.constant 0.000000e+00 : f32
    %82 = vector.broadcast %cst_31 : f32 to vector<16x128xf32>
    %83 = arith.maximumf %81, %82 : vector<16x128xf32>
    %84 = arith.truncf %83 : vector<16x128xf32> to vector<16x128xbf16>
    %c0_32 = arith.constant 0 : index
    %c0_33 = arith.constant 0 : index
    %c0_34 = arith.constant 0 : index
    %85 = vector.load %arg7[%c0_32, %c0_33, %c0_34] : memref<1x128x128xbf16, #tpu.memory_space<vmem>>, vector<1x128x128xbf16>
    %86 = vector.shape_cast %85 : vector<1x128x128xbf16> to vector<128x128xbf16>
    %cst_35 = arith.constant dense<0.000000e+00> : vector<16x128xf32>
    %87 = tpu.matmul %84, %86, %cst_35 {dimension_numbers = #tpu.dot_dimension_numbers<[1], [0], [0], [1], [0, 0, 1, 1], [], []>} : vector<16x128xbf16>, vector<128x128xbf16>, vector<16x128xf32> -> vector<16x128xf32>
    %c0_36 = arith.constant 0 : index
    %c0_37 = arith.constant 0 : index
    %c0_38 = arith.constant 0 : index
    %88 = vector.load %arg8[%c0_36, %c0_37, %c0_38] : memref<1x1x128xf32, #tpu.memory_space<vmem>>, vector<1x1x128xf32>
    %89 = vector.shape_cast %88 : vector<1x1x128xf32> to vector<1x128xf32>
    %90 = vector.broadcast %89 : vector<1x128xf32> to vector<16x128xf32>
    %91 = arith.addf %87, %90 : vector<16x128xf32>
    %cst_39 = arith.constant dense<0.000000e+00> : vector<16xf32>
    %92 = vector.multi_reduction <add>, %91, %cst_39 [1] : vector<16x128xf32> to vector<16xf32>
    %93 = vector.shape_cast %92 : vector<16xf32> to vector<16x1xf32>
    %cst_40 = arith.constant 3.125000e-02 : f32
    %94 = vector.broadcast %cst_40 : f32 to vector<16x1xf32>
    %95 = arith.mulf %93, %94 : vector<16x1xf32>
    %96 = arith.mulf %91, %91 : vector<16x128xf32>
    %cst_41 = arith.constant dense<0.000000e+00> : vector<16xf32>
    %97 = vector.multi_reduction <add>, %96, %cst_41 [1] : vector<16x128xf32> to vector<16xf32>
    %98 = vector.shape_cast %97 : vector<16xf32> to vector<16x1xf32>
    %cst_42 = arith.constant 3.125000e-02 : f32
    %99 = vector.broadcast %cst_42 : f32 to vector<16x1xf32>
    %100 = arith.mulf %98, %99 : vector<16x1xf32>
    %101 = arith.mulf %95, %95 : vector<16x1xf32>
    %102 = arith.subf %100, %101 : vector<16x1xf32>
    %103 = vector.broadcast %95 : vector<16x1xf32> to vector<16x128xf32>
    %104 = arith.subf %91, %103 : vector<16x128xf32>
    %cst_43 = arith.constant 9.99999974E-6 : f32
    %105 = vector.broadcast %cst_43 : f32 to vector<16x1xf32>
    %106 = arith.addf %102, %105 : vector<16x1xf32>
    %107 = math.rsqrt %106 : vector<16x1xf32>
    %108 = vector.broadcast %107 : vector<16x1xf32> to vector<16x128xf32>
    %109 = arith.mulf %104, %108 : vector<16x128xf32>
    %cst_44 = arith.constant 0.000000e+00 : f32
    %110 = vector.broadcast %cst_44 : f32 to vector<16x128xf32>
    %111 = arith.maximumf %109, %110 : vector<16x128xf32>
    %112 = arith.truncf %111 : vector<16x128xf32> to vector<16x128xbf16>
    %c0_45 = arith.constant 0 : index
    %c0_46 = arith.constant 0 : index
    %113 = vector.load %arg9[%c0_45, %c0_46] : memref<128x128xbf16, #tpu.memory_space<vmem>>, vector<128x128xbf16>
    %cst_47 = arith.constant dense<0.000000e+00> : vector<16x128xf32>
    %114 = tpu.matmul %112, %113, %cst_47 {dimension_numbers = #tpu.dot_dimension_numbers<[1], [0], [0], [1], [0, 0, 1, 1], [], []>} : vector<16x128xbf16>, vector<128x128xbf16>, vector<16x128xf32> -> vector<16x128xf32>
    %c0_48 = arith.constant 0 : index
    %c0_49 = arith.constant 0 : index
    %115 = vector.load %arg10[%c0_48, %c0_49] : memref<1x128xf32, #tpu.memory_space<vmem>>, vector<1x128xf32>
    %116 = vector.broadcast %115 : vector<1x128xf32> to vector<16x128xf32>
    %117 = arith.addf %114, %116 : vector<16x128xf32>
    %c0_50 = arith.constant 0 : index
    %c0_51 = arith.constant 0 : index
    %118 = vector.load %arg11[%c0_50, %c0_51] : memref<16x128xf32, #tpu.memory_space<vmem>>, vector<16x128xf32>
    tpu.vector_store %arg11[%c0_50, %c0_51], %117 {strides = array<i32>} : memref<16x128xf32, #tpu.memory_space<vmem>>, vector<16x128xf32>,
    %119 = arith.truncf %57 : vector<16x128xf32> to vector<16x128xbf16>
    %c0_52 = arith.constant 0 : index
    %c0_53 = arith.constant 0 : index
    %120 = vector.load %arg12[%c0_52, %c0_53] : memref<16x128xbf16, #tpu.memory_space<vmem>>, vector<16x128xbf16>
    tpu.vector_store %arg12[%c0_52, %c0_53], %119 {strides = array<i32>} : memref<16x128xbf16, #tpu.memory_space<vmem>>, vector<16x128xbf16>,
    %121 = arith.truncf %26 : vector<16x128xf32> to vector<16x128xbf16>
    %c0_54 = arith.constant 0 : index
    %c0_55 = arith.constant 0 : index
    %122 = vector.load %arg13[%c0_54, %c0_55] : memref<16x128xbf16, #tpu.memory_space<vmem>>, vector<16x128xbf16>
    tpu.vector_store %arg13[%c0_54, %c0_55], %121 {strides = array<i32>} : memref<16x128xbf16, #tpu.memory_space<vmem>>, vector<16x128xbf16>,
    %123 = arith.truncf %53 : vector<16x128xf32> to vector<16x128xbf16>
    %c0_56 = arith.constant 0 : index
    %c0_57 = arith.constant 0 : index
    %124 = vector.load %arg14[%c0_56, %c0_57] : memref<16x128xbf16, #tpu.memory_space<vmem>>, vector<16x128xbf16>
    tpu.vector_store %arg14[%c0_56, %c0_57], %123 {strides = array<i32>} : memref<16x128xbf16, #tpu.memory_space<vmem>>, vector<16x128xbf16>,
    return
  }
  func.func @transform_0(%arg0: i32) -> (i32, i32) {
    %c0_i32 = arith.constant 0 : i32
    %c0_i32_0 = arith.constant 0 : i32
    return %arg0, %c0_i32 : i32, i32
  }
  func.func @transform_1(%arg0: i32) -> (i32, i32) {
    %c0_i32 = arith.constant 0 : i32
    %c0_i32_0 = arith.constant 0 : i32
    return %arg0, %c0_i32 : i32, i32
  }
  func.func @transform_2(%arg0: i32) -> (i32, i32) {
    %c0_i32 = arith.constant 0 : i32
    %c0_i32_0 = arith.constant 0 : i32
    %c0_i32_1 = arith.constant 0 : i32
    return %c0_i32, %c0_i32_0 : i32, i32
  }
  func.func @transform_3(%arg0: i32) -> (i32, i32) {
    %c0_i32 = arith.constant 0 : i32
    %c0_i32_0 = arith.constant 0 : i32
    %c0_i32_1 = arith.constant 0 : i32
    return %c0_i32, %c0_i32_0 : i32, i32
  }
  func.func @transform_4(%arg0: i32) -> (i32, i32) {
    %c0_i32 = arith.constant 0 : i32
    %c0_i32_0 = arith.constant 0 : i32
    %c0_i32_1 = arith.constant 0 : i32
    return %c0_i32, %c0_i32_0 : i32, i32
  }
  func.func @transform_5(%arg0: i32) -> (i32, i32) {
    %c0_i32 = arith.constant 0 : i32
    %c0_i32_0 = arith.constant 0 : i32
    %c0_i32_1 = arith.constant 0 : i32
    return %c0_i32, %c0_i32_0 : i32, i32
  }
  func.func @transform_6(%arg0: i32) -> (i32, i32, i32) {
    %c0_i32 = arith.constant 0 : i32
    %c0_i32_0 = arith.constant 0 : i32
    %c0_i32_1 = arith.constant 0 : i32
    %c0_i32_2 = arith.constant 0 : i32
    return %c0_i32, %c0_i32_0, %c0_i32_1 : i32, i32, i32
  }
  func.func @transform_7(%arg0: i32) -> (i32, i32, i32) {
    %c0_i32 = arith.constant 0 : i32
    %c0_i32_0 = arith.constant 0 : i32
    %c0_i32_1 = arith.constant 0 : i32
    %c0_i32_2 = arith.constant 0 : i32
    return %c0_i32, %c0_i32_0, %c0_i32_1 : i32, i32, i32
  }
  func.func @transform_8(%arg0: i32) -> (i32, i32) {
    %c0_i32 = arith.constant 0 : i32
    %c0_i32_0 = arith.constant 0 : i32
    %c0_i32_1 = arith.constant 0 : i32
    return %c0_i32, %c0_i32_0 : i32, i32
  }
  func.func @transform_9(%arg0: i32) -> (i32, i32) {
    %c0_i32 = arith.constant 0 : i32
    %c0_i32_0 = arith.constant 0 : i32
    %c0_i32_1 = arith.constant 0 : i32
    return %c0_i32, %c0_i32_0 : i32, i32
  }
  func.func @transform_10(%arg0: i32) -> (i32, i32) {
    %c0_i32 = arith.constant 0 : i32
    %c0_i32_0 = arith.constant 0 : i32
    return %arg0, %c0_i32 : i32, i32
  }
  func.func @transform_11(%arg0: i32) -> (i32, i32) {
    %c0_i32 = arith.constant 0 : i32
    %c0_i32_0 = arith.constant 0 : i32
    return %arg0, %c0_i32 : i32, i32
  }
  func.func @transform_12(%arg0: i32) -> (i32, i32) {
    %c0_i32 = arith.constant 0 : i32
    %c0_i32_0 = arith.constant 0 : i32
    return %arg0, %c0_i32 : i32, i32
  }
  func.func @transform_13(%arg0: i32) -> (i32, i32) {
    %c0_i32 = arith.constant 0 : i32
    %c0_i32_0 = arith.constant 0 : i32
    return %arg0, %c0_i32 : i32, i32
  }
}

module attributes {stable_mosaic.version = 11 : i64} {
  func.func @_vae_decoder_kernel(%arg0: i32, %arg1: memref<16x128xbf16, #tpu.memory_space<vmem>>, %arg2: memref<16x128xbf16, #tpu.memory_space<vmem>>, %arg3: memref<128x256xbf16, #tpu.memory_space<vmem>>, %arg4: memref<1x256xf32, #tpu.memory_space<vmem>>, %arg5: memref<128x128xbf16, #tpu.memory_space<vmem>>, %arg6: memref<1x128xf32, #tpu.memory_space<vmem>>, %arg7: memref<1x128x128xbf16, #tpu.memory_space<vmem>>, %arg8: memref<1x1x128xf32, #tpu.memory_space<vmem>>, %arg9: memref<128x128xbf16, #tpu.memory_space<vmem>>, %arg10: memref<1x128xf32, #tpu.memory_space<vmem>>, %arg11: memref<16x128xf32, #tpu.memory_space<vmem>>, %arg12: memref<16x128xbf16, #tpu.memory_space<vmem>>, %arg13: memref<16x128xbf16, #tpu.memory_space<vmem>>, %arg14: memref<16x128xbf16, #tpu.memory_space<vmem>>) attributes {dimension_semantics = [#tpu.dimension_semantics<parallel>], iteration_bounds = array<i64: 1>, scalar_prefetch = 0 : i64, scratch_operands = 0 : i64, tpu.core_type = #tpu.core_type<tc>, window_params = [{transform_indices = @transform_0, window_bounds = array<i64: 16, 128>}, {transform_indices = @transform_1, window_bounds = array<i64: 16, 128>}, {pipeline_mode = #tpu.pipeline_mode<synchronous>, transform_indices = @transform_2, window_bounds = array<i64: 128, 256>}, {pipeline_mode = #tpu.pipeline_mode<synchronous>, transform_indices = @transform_3, window_bounds = array<i64: 1, 256>}, {pipeline_mode = #tpu.pipeline_mode<synchronous>, transform_indices = @transform_4, window_bounds = array<i64: 128, 128>}, {pipeline_mode = #tpu.pipeline_mode<synchronous>, transform_indices = @transform_5, window_bounds = array<i64: 1, 128>}, {pipeline_mode = #tpu.pipeline_mode<synchronous>, transform_indices = @transform_6, window_bounds = array<i64: 1, 128, 128>}, {pipeline_mode = #tpu.pipeline_mode<synchronous>, transform_indices = @transform_7, window_bounds = array<i64: 1, 1, 128>}, {pipeline_mode = #tpu.pipeline_mode<synchronous>, transform_indices = @transform_8, window_bounds = array<i64: 128, 128>}, {pipeline_mode = #tpu.pipeline_mode<synchronous>, transform_indices = @transform_9, window_bounds = array<i64: 1, 128>}, {transform_indices = @transform_10, window_bounds = array<i64: 16, 128>}, {transform_indices = @transform_11, window_bounds = array<i64: 16, 128>}, {transform_indices = @transform_12, window_bounds = array<i64: 16, 128>}, {transform_indices = @transform_13, window_bounds = array<i64: 16, 128>}]} {
    %c0 = arith.constant 0 : index
    %c0_0 = arith.constant 0 : index
    %0 = vector.load %arg1[%c0, %c0_0] : memref<16x128xbf16, #tpu.memory_space<vmem>>, vector<16x128xbf16>
    %c0_1 = arith.constant 0 : index
    %c0_2 = arith.constant 0 : index
    %1 = vector.load %arg3[%c0_1, %c0_2] : memref<128x256xbf16, #tpu.memory_space<vmem>>, vector<128x256xbf16>
    %cst = arith.constant dense<0.000000e+00> : vector<16x256xf32>
    %2 = tpu.matmul %0, %1, %cst {dimension_numbers = #tpu.dot_dimension_numbers<[1], [0], [0], [1], [0, 0, 1, 1], [], []>} : vector<16x128xbf16>, vector<128x256xbf16>, vector<16x256xf32> -> vector<16x256xf32>
    %c0_3 = arith.constant 0 : index
    %c0_4 = arith.constant 0 : index
    %3 = vector.load %arg4[%c0_3, %c0_4] : memref<1x256xf32, #tpu.memory_space<vmem>>, vector<1x256xf32>
    %4 = vector.broadcast %3 : vector<1x256xf32> to vector<16x256xf32>
    %5 = arith.addf %2, %4 : vector<16x256xf32>
    %6 = vector.extract_strided_slice %5 {offsets = [0, 0], sizes = [16, 128], strides = [1, 1]} : vector<16x256xf32> to vector<16x128xf32>
    %cst_5 = arith.constant dense<0.000000e+00> : vector<16xf32>
    %7 = vector.multi_reduction <add>, %6, %cst_5 [1] : vector<16x128xf32> to vector<16xf32>
    %8 = vector.shape_cast %7 : vector<16xf32> to vector<16x1xf32>
    %cst_6 = arith.constant 6.250000e-02 : f32
    %9 = vector.broadcast %cst_6 : f32 to vector<16x1xf32>
    %10 = arith.mulf %8, %9 : vector<16x1xf32>
    %11 = arith.mulf %6, %6 : vector<16x128xf32>
    %cst_7 = arith.constant dense<0.000000e+00> : vector<16xf32>
    %12 = vector.multi_reduction <add>, %11, %cst_7 [1] : vector<16x128xf32> to vector<16xf32>
    %13 = vector.shape_cast %12 : vector<16xf32> to vector<16x1xf32>
    %cst_8 = arith.constant 6.250000e-02 : f32
    %14 = vector.broadcast %cst_8 : f32 to vector<16x1xf32>
    %15 = arith.mulf %13, %14 : vector<16x1xf32>
    %16 = arith.mulf %10, %10 : vector<16x1xf32>
    %17 = arith.subf %15, %16 : vector<16x1xf32>
    %18 = vector.broadcast %10 : vector<16x1xf32> to vector<16x128xf32>
    %19 = arith.subf %6, %18 : vector<16x128xf32>
    %cst_9 = arith.constant 9.99999974E-6 : f32
    %20 = vector.broadcast %cst_9 : f32 to vector<16x1xf32>
    %21 = arith.addf %17, %20 : vector<16x1xf32>
    %22 = math.rsqrt %21 : vector<16x1xf32>
    %23 = vector.broadcast %22 : vector<16x1xf32> to vector<16x128xf32>
    %24 = arith.mulf %19, %23 : vector<16x128xf32>
    %cst_10 = arith.constant 0.000000e+00 : f32
    %25 = vector.broadcast %cst_10 : f32 to vector<16x128xf32>
    %26 = arith.maximumf %24, %25 : vector<16x128xf32>
    %27 = vector.extract_strided_slice %5 {offsets = [0, 128], sizes = [16, 128], strides = [1, 1]} : vector<16x256xf32> to vector<16x128xf32>
    %cst_11 = arith.constant dense<0.000000e+00> : vector<16xf32>
    %28 = vector.multi_reduction <add>, %27, %cst_11 [1] : vector<16x128xf32> to vector<16xf32>
    %29 = vector.shape_cast %28 : vector<16xf32> to vector<16x1xf32>
    %cst_12 = arith.constant 6.250000e-02 : f32
    %30 = vector.broadcast %cst_12 : f32 to vector<16x1xf32>
    %31 = arith.mulf %29, %30 : vector<16x1xf32>
    %32 = arith.mulf %27, %27 : vector<16x128xf32>
    %cst_13 = arith.constant dense<0.000000e+00> : vector<16xf32>
    %33 = vector.multi_reduction <add>, %32, %cst_13 [1] : vector<16x128xf32> to vector<16xf32>
    %34 = vector.shape_cast %33 : vector<16xf32> to vector<16x1xf32>
    %cst_14 = arith.constant 6.250000e-02 : f32
    %35 = vector.broadcast %cst_14 : f32 to vector<16x1xf32>
    %36 = arith.mulf %34, %35 : vector<16x1xf32>
    %37 = arith.mulf %31, %31 : vector<16x1xf32>
    %38 = arith.subf %36, %37 : vector<16x1xf32>
    %39 = vector.broadcast %31 : vector<16x1xf32> to vector<16x128xf32>
    %40 = arith.subf %27, %39 : vector<16x128xf32>
    %cst_15 = arith.constant 9.99999974E-6 : f32
    %41 = vector.broadcast %cst_15 : f32 to vector<16x1xf32>
    %42 = arith.addf %38, %41 : vector<16x1xf32>
    %43 = math.rsqrt %42 : vector<16x1xf32>
    %44 = vector.broadcast %43 : vector<16x1xf32> to vector<16x128xf32>
    %45 = arith.mulf %40, %44 : vector<16x128xf32>
    %cst_16 = arith.constant 0.000000e+00 : f32
    %46 = vector.broadcast %cst_16 : f32 to vector<16x128xf32>
    %47 = arith.maximumf %45, %46 : vector<16x128xf32>
    %48 = math.exp %47 : vector<16x128xf32>
    %cst_17 = arith.constant 9.99999974E-5 : f32
    %49 = vector.broadcast %cst_17 : f32 to vector<16x128xf32>
    %50 = arith.addf %48, %49 : vector<16x128xf32>
    %51 = math.sqrt %50 : vector<16x128xf32>
    %cst_18 = arith.constant 1.000000e+00 : f32
    %52 = vector.broadcast %cst_18 : f32 to vector<16x128xf32>
    %53 = arith.mulf %52, %51 : vector<16x128xf32>
    %c0_19 = arith.constant 0 : index
    %c0_20 = arith.constant 0 : index
    %54 = vector.load %arg2[%c0_19, %c0_20] : memref<16x128xbf16, #tpu.memory_space<vmem>>, vector<16x128xbf16>
    %55 = arith.extf %54 : vector<16x128xbf16> to vector<16x128xf32>
    %56 = arith.mulf %53, %55 : vector<16x128xf32>
    %57 = arith.addf %26, %56 : vector<16x128xf32>
    %58 = arith.truncf %57 : vector<16x128xf32> to vector<16x128xbf16>
    %c0_21 = arith.constant 0 : index
    %c0_22 = arith.constant 0 : index
    %59 = vector.load %arg5[%c0_21, %c0_22] : memref<128x128xbf16, #tpu.memory_space<vmem>>, vector<128x128xbf16>
    %cst_23 = arith.constant dense<0.000000e+00> : vector<16x128xf32>
    %60 = tpu.matmul %58, %59, %cst_23 {dimension_numbers = #tpu.dot_dimension_numbers<[1], [0], [0], [1], [0, 0, 1, 1], [], []>} : vector<16x128xbf16>, vector<128x128xbf16>, vector<16x128xf32> -> vector<16x128xf32>
    %c0_24 = arith.constant 0 : index
    %c0_25 = arith.constant 0 : index
    %61 = vector.load %arg6[%c0_24, %c0_25] : memref<1x128xf32, #tpu.memory_space<vmem>>, vector<1x128xf32>
    %62 = vector.broadcast %61 : vector<1x128xf32> to vector<16x128xf32>
    %63 = arith.addf %60, %62 : vector<16x128xf32>
    %cst_26 = arith.constant dense<0.000000e+00> : vector<16xf32>
    %64 = vector.multi_reduction <add>, %63, %cst_26 [1] : vector<16x128xf32> to vector<16xf32>
    %65 = vector.shape_cast %64 : vector<16xf32> to vector<16x1xf32>
    %cst_27 = arith.constant 3.125000e-02 : f32
    %66 = vector.broadcast %cst_27 : f32 to vector<16x1xf32>
    %67 = arith.mulf %65, %66 : vector<16x1xf32>
    %68 = arith.mulf %63, %63 : vector<16x128xf32>
    %cst_28 = arith.constant dense<0.000000e+00> : vector<16xf32>
    %69 = vector.multi_reduction <add>, %68, %cst_28 [1] : vector<16x128xf32> to vector<16xf32>
    %70 = vector.shape_cast %69 : vector<16xf32> to vector<16x1xf32>
    %cst_29 = arith.constant 3.125000e-02 : f32
    %71 = vector.broadcast %cst_29 : f32 to vector<16x1xf32>
    %72 = arith.mulf %70, %71 : vector<16x1xf32>
    %73 = arith.mulf %67, %67 : vector<16x1xf32>
    %74 = arith.subf %72, %73 : vector<16x1xf32>
    %75 = vector.broadcast %67 : vector<16x1xf32> to vector<16x128xf32>
    %76 = arith.subf %63, %75 : vector<16x128xf32>
    %cst_30 = arith.constant 9.99999974E-6 : f32
    %77 = vector.broadcast %cst_30 : f32 to vector<16x1xf32>
    %78 = arith.addf %74, %77 : vector<16x1xf32>
    %79 = math.rsqrt %78 : vector<16x1xf32>
    %80 = vector.broadcast %79 : vector<16x1xf32> to vector<16x128xf32>
    %81 = arith.mulf %76, %80 : vector<16x128xf32>
    %cst_31 = arith.constant 0.000000e+00 : f32
    %82 = vector.broadcast %cst_31 : f32 to vector<16x128xf32>
    %83 = arith.maximumf %81, %82 : vector<16x128xf32>
    %84 = arith.truncf %83 : vector<16x128xf32> to vector<16x128xbf16>
    %c0_32 = arith.constant 0 : index
    %c0_33 = arith.constant 0 : index
    %c0_34 = arith.constant 0 : index
    %85 = vector.load %arg7[%c0_32, %c0_33, %c0_34] : memref<1x128x128xbf16, #tpu.memory_space<vmem>>, vector<1x128x128xbf16>
    %86 = vector.shape_cast %85 : vector<1x128x128xbf16> to vector<128x128xbf16>
    %cst_35 = arith.constant dense<0.000000e+00> : vector<16x128xf32>
    %87 = tpu.matmul %84, %86, %cst_35 {dimension_numbers = #tpu.dot_dimension_numbers<[1], [0], [0], [1], [0, 0, 1, 1], [], []>} : vector<16x128xbf16>, vector<128x128xbf16>, vector<16x128xf32> -> vector<16x128xf32>
    %c0_36 = arith.constant 0 : index
    %c0_37 = arith.constant 0 : index
    %c0_38 = arith.constant 0 : index
    %88 = vector.load %arg8[%c0_36, %c0_37, %c0_38] : memref<1x1x128xf32, #tpu.memory_space<vmem>>, vector<1x1x128xf32>
    %89 = vector.shape_cast %88 : vector<1x1x128xf32> to vector<1x128xf32>
    %90 = vector.broadcast %89 : vector<1x128xf32> to vector<16x128xf32>
    %91 = arith.addf %87, %90 : vector<16x128xf32>
    %cst_39 = arith.constant dense<0.000000e+00> : vector<16xf32>
    %92 = vector.multi_reduction <add>, %91, %cst_39 [1] : vector<16x128xf32> to vector<16xf32>
    %93 = vector.shape_cast %92 : vector<16xf32> to vector<16x1xf32>
    %cst_40 = arith.constant 3.125000e-02 : f32
    %94 = vector.broadcast %cst_40 : f32 to vector<16x1xf32>
    %95 = arith.mulf %93, %94 : vector<16x1xf32>
    %96 = arith.mulf %91, %91 : vector<16x128xf32>
    %cst_41 = arith.constant dense<0.000000e+00> : vector<16xf32>
    %97 = vector.multi_reduction <add>, %96, %cst_41 [1] : vector<16x128xf32> to vector<16xf32>
    %98 = vector.shape_cast %97 : vector<16xf32> to vector<16x1xf32>
    %cst_42 = arith.constant 3.125000e-02 : f32
    %99 = vector.broadcast %cst_42 : f32 to vector<16x1xf32>
    %100 = arith.mulf %98, %99 : vector<16x1xf32>
    %101 = arith.mulf %95, %95 : vector<16x1xf32>
    %102 = arith.subf %100, %101 : vector<16x1xf32>
    %103 = vector.broadcast %95 : vector<16x1xf32> to vector<16x128xf32>
    %104 = arith.subf %91, %103 : vector<16x128xf32>
    %cst_43 = arith.constant 9.99999974E-6 : f32
    %105 = vector.broadcast %cst_43 : f32 to vector<16x1xf32>
    %106 = arith.addf %102, %105 : vector<16x1xf32>
    %107 = math.rsqrt %106 : vector<16x1xf32>
    %108 = vector.broadcast %107 : vector<16x1xf32> to vector<16x128xf32>
    %109 = arith.mulf %104, %108 : vector<16x128xf32>
    %cst_44 = arith.constant 0.000000e+00 : f32
    %110 = vector.broadcast %cst_44 : f32 to vector<16x128xf32>
    %111 = arith.maximumf %109, %110 : vector<16x128xf32>
    %112 = arith.truncf %111 : vector<16x128xf32> to vector<16x128xbf16>
    %c0_45 = arith.constant 0 : index
    %c0_46 = arith.constant 0 : index
    %113 = vector.load %arg9[%c0_45, %c0_46] : memref<128x128xbf16, #tpu.memory_space<vmem>>, vector<128x128xbf16>
    %cst_47 = arith.constant dense<0.000000e+00> : vector<16x128xf32>
    %114 = tpu.matmul %112, %113, %cst_47 {dimension_numbers = #tpu.dot_dimension_numbers<[1], [0], [0], [1], [0, 0, 1, 1], [], []>} : vector<16x128xbf16>, vector<128x128xbf16>, vector<16x128xf32> -> vector<16x128xf32>
    %c0_48 = arith.constant 0 : index
    %c0_49 = arith.constant 0 : index
    %115 = vector.load %arg10[%c0_48, %c0_49] : memref<1x128xf32, #tpu.memory_space<vmem>>, vector<1x128xf32>
    %116 = vector.broadcast %115 : vector<1x128xf32> to vector<16x128xf32>
    %117 = arith.addf %114, %116 : vector<16x128xf32>
    %c0_50 = arith.constant 0 : index
    %c0_51 = arith.constant 0 : index
    %118 = vector.load %arg11[%c0_50, %c0_51] : memref<16x128xf32, #tpu.memory_space<vmem>>, vector<16x128xf32>
    tpu.vector_store %arg11[%c0_50, %c0_51], %117 {strides = array<i32>} : memref<16x128xf32, #tpu.memory_space<vmem>>, vector<16x128xf32>,
    %119 = arith.truncf %57 : vector<16x128xf32> to vector<16x128xbf16>
    %c0_52 = arith.constant 0 : index
    %c0_53 = arith.constant 0 : index
    %120 = vector.load %arg12[%c0_52, %c0_53] : memref<16x128xbf16, #tpu.memory_space<vmem>>, vector<16x128xbf16>
    tpu.vector_store %arg12[%c0_52, %c0_53], %119 {strides = array<i32>} : memref<16x128xbf16, #tpu.memory_space<vmem>>, vector<16x128xbf16>,
    %121 = arith.truncf %26 : vector<16x128xf32> to vector<16x128xbf16>
    %c0_54 = arith.constant 0 : index
    %c0_55 = arith.constant 0 : index
    %122 = vector.load %arg13[%c0_54, %c0_55] : memref<16x128xbf16, #tpu.memory_space<vmem>>, vector<16x128xbf16>
    tpu.vector_store %arg13[%c0_54, %c0_55], %121 {strides = array<i32>} : memref<16x128xbf16, #tpu.memory_space<vmem>>, vector<16x128xbf16>,
    %123 = arith.truncf %53 : vector<16x128xf32> to vector<16x128xbf16>
    %c0_56 = arith.constant 0 : index
    %c0_57 = arith.constant 0 : index
    %124 = vector.load %arg14[%c0_56, %c0_57] : memref<16x128xbf16, #tpu.memory_space<vmem>>, vector<16x128xbf16>
    tpu.vector_store %arg14[%c0_56, %c0_57], %123 {strides = array<i32>} : memref<16x128xbf16, #tpu.memory_space<vmem>>, vector<16x128xbf16>,
    return
  }
  func.func @transform_0(%arg0: i32) -> (i32, i32) {
    %c0_i32 = arith.constant 0 : i32
    %c0_i32_0 = arith.constant 0 : i32
    return %arg0, %c0_i32 : i32, i32
  }
  func.func @transform_1(%arg0: i32) -> (i32, i32) {
    %c0_i32 = arith.constant 0 : i32
    %c0_i32_0 = arith.constant 0 : i32
    return %arg0, %c0_i32 : i32, i32
  }
  func.func @transform_2(%arg0: i32) -> (i32, i32) {
    %c0_i32 = arith.constant 0 : i32
    %c0_i32_0 = arith.constant 0 : i32
    %c0_i32_1 = arith.constant 0 : i32
    return %c0_i32, %c0_i32_0 : i32, i32
  }
  func.func @transform_3(%arg0: i32) -> (i32, i32) {
    %c0_i32 = arith.constant 0 : i32
    %c0_i32_0 = arith.constant 0 : i32
    %c0_i32_1 = arith.constant 0 : i32
    return %c0_i32, %c0_i32_0 : i32, i32
  }
  func.func @transform_4(%arg0: i32) -> (i32, i32) {
    %c0_i32 = arith.constant 0 : i32
    %c0_i32_0 = arith.constant 0 : i32
    %c0_i32_1 = arith.constant 0 : i32
    return %c0_i32, %c0_i32_0 : i32, i32
  }
  func.func @transform_5(%arg0: i32) -> (i32, i32) {
    %c0_i32 = arith.constant 0 : i32
    %c0_i32_0 = arith.constant 0 : i32
    %c0_i32_1 = arith.constant 0 : i32
    return %c0_i32, %c0_i32_0 : i32, i32
  }
  func.func @transform_6(%arg0: i32) -> (i32, i32, i32) {
    %c0_i32 = arith.constant 0 : i32
    %c0_i32_0 = arith.constant 0 : i32
    %c0_i32_1 = arith.constant 0 : i32
    %c0_i32_2 = arith.constant 0 : i32
    return %c0_i32, %c0_i32_0, %c0_i32_1 : i32, i32, i32
  }
  func.func @transform_7(%arg0: i32) -> (i32, i32, i32) {
    %c0_i32 = arith.constant 0 : i32
    %c0_i32_0 = arith.constant 0 : i32
    %c0_i32_1 = arith.constant 0 : i32
    %c0_i32_2 = arith.constant 0 : i32
    return %c0_i32, %c0_i32_0, %c0_i32_1 : i32, i32, i32
  }
  func.func @transform_8(%arg0: i32) -> (i32, i32) {
    %c0_i32 = arith.constant 0 : i32
    %c0_i32_0 = arith.constant 0 : i32
    %c0_i32_1 = arith.constant 0 : i32
    return %c0_i32, %c0_i32_0 : i32, i32
  }
  func.func @transform_9(%arg0: i32) -> (i32, i32) {
    %c0_i32 = arith.constant 0 : i32
    %c0_i32_0 = arith.constant 0 : i32
    %c0_i32_1 = arith.constant 0 : i32
    return %c0_i32, %c0_i32_0 : i32, i32
  }
  func.func @transform_10(%arg0: i32) -> (i32, i32) {
    %c0_i32 = arith.constant 0 : i32
    %c0_i32_0 = arith.constant 0 : i32
    return %arg0, %c0_i32 : i32, i32
  }
  func.func @transform_11(%arg0: i32) -> (i32, i32) {
    %c0_i32 = arith.constant 0 : i32
    %c0_i32_0 = arith.constant 0 : i32
    return %arg0, %c0_i32 : i32, i32
  }
  func.func @transform_12(%arg0: i32) -> (i32, i32) {
    %c0_i32 = arith.constant 0 : i32
    %c0_i32_0 = arith.constant 0 : i32
    return %arg0, %c0_i32 : i32, i32
  }
  func.func @transform_13(%arg0: i32) -> (i32, i32) {
    %c0_i32 = arith.constant 0 : i32
    %c0_i32_0 = arith.constant 0 : i32
    return %arg0, %c0_i32 : i32, i32
  }
}

</mosaic_0001>

<llo_original>
// kernel: tpu_custom_call.1
$region0: #{tpu_custom_call.1}
  #allocation0 [shape = 'u32[]', space=smem, size = 0x4, offset = 0x4, fixed_abs, tag = 'smem constant byte address 0x4 - core index']
  #allocation1 [shape = 'u32[144,128]{1,0:T(1,128)}', space=vmem, size = 0x12000, scoped, tag = 'internal scratch']
  %s0 = inlined_call_operand.hbm [shape: bf16[16,128], index: 0, kind: input, shape index: {}]
  %s1 = inlined_call_operand.hbm [shape: bf16[16,128], index: 1, kind: input, shape index: {}]
  %s2 = inlined_call_operand.hbm [shape: bf16[128,256], index: 2, kind: input, shape index: {}]
  %s3 = inlined_call_operand.vmem [shape: f32[1,256], index: 3, kind: input, shape index: {}]
  %s4 = inlined_call_operand.hbm [shape: bf16[128,128], index: 4, kind: input, shape index: {}]
  %s5 = inlined_call_operand.vmem [shape: f32[1,128], index: 5, kind: input, shape index: {}]
  %s6 = inlined_call_operand.hbm [shape: bf16[1,128,128], index: 6, kind: input, shape index: {}]
  %s7 = inlined_call_operand.vmem [shape: f32[1,1,128], index: 7, kind: input, shape index: {}]
  %s8 = inlined_call_operand.hbm [shape: bf16[128,128], index: 8, kind: input, shape index: {}]
  %s9 = inlined_call_operand.vmem [shape: f32[1,128], index: 9, kind: input, shape index: {}]
  %s10 = inlined_call_operand.hbm [shape: f32[16,128], index: 10, kind: output, shape index: {0}]
  %s11 = inlined_call_operand.hbm [shape: bf16[16,128], index: 11, kind: output, shape index: {1}]
  %s12 = inlined_call_operand.hbm [shape: bf16[16,128], index: 12, kind: output, shape index: {2}]
  %s13 = inlined_call_operand.hbm [shape: bf16[16,128], index: 13, kind: output, shape index: {3}]
  %14 = xla_tuple %s10, %s11, %s12, %s13
  %s15 = sld [smem:[#allocation0]]
  $region98: #{tpu_custom_call.1} parent=0
    _
  %s17 = ssub.s32 1, %s15
  %s18 = scalar_select 0, %s17, %s15
  $region1: #{tpu_custom_call.1} parent=0
    #allocation2 [shape = 'u8[4096]{0}', space=vmem, size = 0x1000, scoped, tag = 'input window, operand 0, single buffered']
    #allocation3 [shape = 's32[1]{0}', space=sflag, size = 0x4, scoped, tag = 'scoped memory for tpu_custom_call.1']
    #allocation4 [shape = 's32[1]{0}', space=sflag, size = 0x4, scoped, tag = 'scoped memory for tpu_custom_call.1']
    #allocation5 [shape = 'u8[4096]{0}', space=vmem, size = 0x1000, scoped, tag = 'input window, operand 1, single buffered']
    #allocation6 [shape = 's32[1]{0}', space=sflag, size = 0x4, scoped, tag = 'scoped memory for tpu_custom_call.1']
    #allocation7 [shape = 'u8[65536]{0}', space=vmem, size = 0x10000, scoped, tag = 'input window, operand 2, single buffered']
    #allocation8 [shape = 'u8[32768]{0}', space=vmem, size = 0x8000, scoped, tag = 'input window, operand 4, single buffered']
    #allocation9 [shape = 's32[1]{0}', space=sflag, size = 0x4, scoped, tag = 'scoped memory for tpu_custom_call.1']
    #allocation10 [shape = 'u8[32768]{0}', space=vmem, size = 0x8000, scoped, tag = 'input window, operand 6, single buffered']
    #allocation11 [shape = 'u8[32768]{0}', space=vmem, size = 0x8000, scoped, tag = 'input window, operand 8, single buffered']
    #allocation12 [shape = 's32[1]{0}', space=sflag, size = 0x4, scoped, tag = 'scoped memory for tpu_custom_call.1']
    #allocation13 [shape = 'u8[8192]{0}', space=vmem, size = 0x2000, scoped, tag = 'output window, operand 0, single buffered']
    #allocation14 [shape = 'u8[4096]{0}', space=vmem, size = 0x1000, scoped, tag = 'output window, operand 1, single buffered']
    #allocation15 [shape = 's32[1]{0}', space=sflag, size = 0x4, scoped, tag = 'scoped memory for tpu_custom_call.1']
    #allocation16 [shape = 'u8[4096]{0}', space=vmem, size = 0x1000, scoped, tag = 'output window, operand 2, single buffered']
    #allocation17 [shape = 'u8[4096]{0}', space=vmem, size = 0x1000, scoped, tag = 'output window, operand 3, single buffered']
    #allocation18 [shape = 's32[1]{0}', space=sflag, size = 0x4, scoped, tag = 'scoped memory for tpu_custom_call.1']
    %19 = vsyncpa [#allocation3], 0
    %20 = vsyncpa [#allocation6], 0
    %21 = vsyncpa [#allocation9], 0
    %22 = vsyncpa [#allocation12], 0
    %23 = vsyncpa [#allocation4], 0
    %24 = vsyncpa [#allocation15], 0
    %25 = vsyncpa [#allocation18], 0
    // Predicated region
    $region2: #{tpu_custom_call.1} parent=1 // pred_check
      _
    $region3: #{tpu_custom_call.1} parent=1 // pred_check_branch
      %27 = sbr.rel (0) target = $region5
    $region4: #{tpu_custom_call.1} parent=1 // pred_region
      %s29 = ssub.s32 128, 128
      %30 = vsyncadd [#allocation3], %s29
      %s31 = sshll.u32 [#allocation2], 4
      %s32 = int_to_ptr.vmem [resolvable:$true] %s31
      %37 = dma.hbm_to_vmem [thread:$0]  %s0, 128, %s32, [#allocation3], 64, 64, 4
    $region5: #{tpu_custom_call.1} parent=1 // pred_fallthru
      _
    // Predicated region
    $region6: #{tpu_custom_call.1} parent=1 // pred_check
      _
    $region7: #{tpu_custom_call.1} parent=1 // pred_check_branch
      %39 = sbr.rel (0) target = $region9
    $region8: #{tpu_custom_call.1} parent=1 // pred_region
      %s41 = ssub.s32 128, 128
      %42 = vsyncadd [#allocation6], %s41
      %s43 = sshll.u32 [#allocation5], 4
      %s44 = int_to_ptr.vmem [resolvable:$true] %s43
      %49 = dma.hbm_to_vmem [thread:$0]  %s1, 128, %s44, [#allocation6], 64, 64, 4
    $region9: #{tpu_custom_call.1} parent=1 // pred_fallthru
      _
    // Predicated region
    $region10: #{tpu_custom_call.1} parent=1 // pred_check
      _
    $region11: #{tpu_custom_call.1} parent=1 // pred_check_branch
      %51 = sbr.rel (0) target = $region13
    $region12: #{tpu_custom_call.1} parent=1 // pred_region
      %s53 = ssub.s32 2048, 2048
      %54 = vsyncadd [#allocation6], %s53
      %s55 = sshll.u32 [#allocation7], 4
      %s56 = int_to_ptr.vmem [resolvable:$true] %s55
      %61 = dma.hbm_to_vmem [thread:$0]  %s2, 2048, %s56, [#allocation6], 128, 128, 8
    $region13: #{tpu_custom_call.1} parent=1 // pred_fallthru
      _
    // Predicated region
    $region14: #{tpu_custom_call.1} parent=1 // pred_check
      _
    $region15: #{tpu_custom_call.1} parent=1 // pred_check_branch
      %63 = sbr.rel (0) target = $region17
    $region16: #{tpu_custom_call.1} parent=1 // pred_region
      _
    $region17: #{tpu_custom_call.1} parent=1 // pred_fallthru
      _
    // Predicated region
    $region18: #{tpu_custom_call.1} parent=1 // pred_check
      _
    $region19: #{tpu_custom_call.1} parent=1 // pred_check_branch
      %65 = sbr.rel (0) target = $region21
    $region20: #{tpu_custom_call.1} parent=1 // pred_region
      %s67 = ssub.s32 1024, 1024
      %68 = vsyncadd [#allocation9], %s67
      %s69 = sshll.u32 [#allocation8], 4
      %s70 = int_to_ptr.vmem [resolvable:$true] %s69
      %75 = dma.hbm_to_vmem [thread:$0]  %s4, 1024, %s70, [#allocation9], 64, 64, 4
    $region21: #{tpu_custom_call.1} parent=1 // pred_fallthru
      _
    // Predicated region
    $region22: #{tpu_custom_call.1} parent=1 // pred_check
      _
    $region23: #{tpu_custom_call.1} parent=1 // pred_check_branch
      %77 = sbr.rel (0) target = $region25
    $region24: #{tpu_custom_call.1} parent=1 // pred_region
      _
    $region25: #{tpu_custom_call.1} parent=1 // pred_fallthru
      _
    // Predicated region
    $region26: #{tpu_custom_call.1} parent=1 // pred_check
      _
    $region27: #{tpu_custom_call.1} parent=1 // pred_check_branch
      %79 = sbr.rel (0) target = $region29
    $region28: #{tpu_custom_call.1} parent=1 // pred_region
      %s81 = ssub.s32 1024, 1024
      %82 = vsyncadd [#allocation9], %s81
      %s83 = sshll.u32 [#allocation10], 4
      %s84 = int_to_ptr.vmem [resolvable:$true] %s83
      %89 = dma.hbm_to_vmem [thread:$0]  %s6, 1024, %s84, [#allocation9], 64, 64, 4
    $region29: #{tpu_custom_call.1} parent=1 // pred_fallthru
      _
    // Predicated region
    $region30: #{tpu_custom_call.1} parent=1 // pred_check
      _
    $region31: #{tpu_custom_call.1} parent=1 // pred_check_branch
      %91 = sbr.rel (0) target = $region33
    $region32: #{tpu_custom_call.1} parent=1 // pred_region
      _
    $region33: #{tpu_custom_call.1} parent=1 // pred_fallthru
      _
    // Predicated region
    $region34: #{tpu_custom_call.1} parent=1 // pred_check
      _
    $region35: #{tpu_custom_call.1} parent=1 // pred_check_branch
      %93 = sbr.rel (0) target = $region37
    $region36: #{tpu_custom_call.1} parent=1 // pred_region
      %s95 = ssub.s32 1024, 1024
      %96 = vsyncadd [#allocation12], %s95
      %s97 = sshll.u32 [#allocation11], 4
      %s98 = int_to_ptr.vmem [resolvable:$true] %s97
      %103 = dma.hbm_to_vmem [thread:$0]  %s8, 1024, %s98, [#allocation12], 64, 64, 4
    $region37: #{tpu_custom_call.1} parent=1 // pred_fallthru
      _
    // Predicated region
    $region38: #{tpu_custom_call.1} parent=1 // pred_check
      _
    $region39: #{tpu_custom_call.1} parent=1 // pred_check_branch
      %105 = sbr.rel (0) target = $region41
    $region40: #{tpu_custom_call.1} parent=1 // pred_region
      _
    $region41: #{tpu_custom_call.1} parent=1 // pred_fallthru
      _
    // Predicated region
    $region42: #{tpu_custom_call.1} parent=1 // pred_check
      _
    $region43: #{tpu_custom_call.1} parent=1 // pred_check_branch
      %107 = sbr.rel (0) target = $region45
    $region44: #{tpu_custom_call.1} parent=1 // pred_region
      %108 = dma.done [#allocation3], 128
    $region45: #{tpu_custom_call.1} parent=1 // pred_fallthru
      _
    // Predicated region
    $region46: #{tpu_custom_call.1} parent=1 // pred_check
      _
    $region47: #{tpu_custom_call.1} parent=1 // pred_check_branch
      %110 = sbr.rel (0) target = $region49
    $region48: #{tpu_custom_call.1} parent=1 // pred_region
      %111 = dma.done [#allocation6], 128
    $region49: #{tpu_custom_call.1} parent=1 // pred_fallthru
      _
    // Predicated region
    $region50: #{tpu_custom_call.1} parent=1 // pred_check
      _
    $region51: #{tpu_custom_call.1} parent=1 // pred_check_branch
      %113 = sbr.rel (0) target = $region53
    $region52: #{tpu_custom_call.1} parent=1 // pred_region
      %114 = dma.done [#allocation6], 2048
    $region53: #{tpu_custom_call.1} parent=1 // pred_fallthru
      _
    // Predicated region
    $region54: #{tpu_custom_call.1} parent=1 // pred_check
      _
    $region55: #{tpu_custom_call.1} parent=1 // pred_check_branch
      %116 = sbr.rel (0) target = $region57
    $region56: #{tpu_custom_call.1} parent=1 // pred_region
      %117 = dma.done [#allocation9], 1024
    $region57: #{tpu_custom_call.1} parent=1 // pred_fallthru
      _
    // Predicated region
    $region58: #{tpu_custom_call.1} parent=1 // pred_check
      _
    $region59: #{tpu_custom_call.1} parent=1 // pred_check_branch
      %119 = sbr.rel (0) target = $region61
    $region60: #{tpu_custom_call.1} parent=1 // pred_region
      %120 = dma.done [#allocation9], 1024
    $region61: #{tpu_custom_call.1} parent=1 // pred_fallthru
      _
    // Predicated region
    $region62: #{tpu_custom_call.1} parent=1 // pred_check
      _
    $region63: #{tpu_custom_call.1} parent=1 // pred_check_branch
      %122 = sbr.rel (0) target = $region65
    $region64: #{tpu_custom_call.1} parent=1 // pred_region
      %123 = dma.done [#allocation12], 1024
    $region65: #{tpu_custom_call.1} parent=1 // pred_fallthru
      _
    %v125 = vld [vmem:[#allocation2] sm:$0xf]
    %v126 = vld [vmem:[#allocation2 + $0x4] sm:$0xf]
    %v127 = vld [vmem:[#allocation7] sm:$0xff]
    %v128 = vld [vmem:[#allocation7 + $0x8] sm:$0xff]
    %v129 = vld [vmem:[#allocation7 + $0x10] sm:$0xff]
    %v130 = vld [vmem:[#allocation7 + $0x18] sm:$0xff]
    %v131 = vld [vmem:[#allocation7 + $0x20] sm:$0xff]
    %v132 = vld [vmem:[#allocation7 + $0x28] sm:$0xff]
    %v133 = vld [vmem:[#allocation7 + $0x30] sm:$0xff]
    %v134 = vld [vmem:[#allocation7 + $0x38] sm:$0xff]
    %v135 = vld [vmem:[#allocation7 + $0x40] sm:$0xff]
    %v136 = vld [vmem:[#allocation7 + $0x48] sm:$0xff]
    %v137 = vld [vmem:[#allocation7 + $0x50] sm:$0xff]
    %v138 = vld [vmem:[#allocation7 + $0x58] sm:$0xff]
    %v139 = vld [vmem:[#allocation7 + $0x60] sm:$0xff]
    %v140 = vld [vmem:[#allocation7 + $0x68] sm:$0xff]
    %v141 = vld [vmem:[#allocation7 + $0x70] sm:$0xff]
    %v142 = vld [vmem:[#allocation7 + $0x78] sm:$0xff]
    %v143 = vld [vmem:[%s3] sm:$0x3]
    %v145 = vlaneseq
    %v146 = vshrl.u32 %v145, 7
    %v147 = vsub.s32 0, %v146
    %v148 = vrot.slane %v143, %v147
    %v149 = vlaneseq
    %v150 = vshrl.u32 %v149, 7
    %v151 = vsub.s32 1, %v150
    %v152 = vrot.slane %v143, %v151
    %v157 = vunpack.c.l.b16 %v125
    %v158 = vunpack.c.l.b16 %v126
    %v159 = vpack.c.b16 %v158, %v157
    %v177 = vunpack.c.l.b16 %v127
    %v178 = vunpack.c.h.b16 %v127
    %v179 = vunpack.c.l.b16 %v128
    %v180 = vunpack.c.h.b16 %v128
    %v181 = vunpack.c.l.b16 %v129
    %v182 = vunpack.c.h.b16 %v129
    %v183 = vunpack.c.l.b16 %v130
    %v184 = vunpack.c.h.b16 %v130
    %v185 = vunpack.c.l.b16 %v131
    %v186 = vunpack.c.h.b16 %v131
    %v187 = vunpack.c.l.b16 %v132
    %v188 = vunpack.c.h.b16 %v132
    %v189 = vunpack.c.l.b16 %v133
    %v190 = vunpack.c.h.b16 %v133
    %v191 = vunpack.c.l.b16 %v134
    %v192 = vunpack.c.h.b16 %v134
    %v193 = vunpack.c.l.b16 %v135
    %v194 = vunpack.c.h.b16 %v135
    %v195 = vunpack.c.l.b16 %v136
    %v196 = vunpack.c.h.b16 %v136
    %v197 = vunpack.c.l.b16 %v137
    %v198 = vunpack.c.h.b16 %v137
    %v199 = vunpack.c.l.b16 %v138
    %v200 = vunpack.c.h.b16 %v138
    %v201 = vunpack.c.l.b16 %v139
    %v202 = vunpack.c.h.b16 %v139
    %v203 = vunpack.c.l.b16 %v140
    %v204 = vunpack.c.h.b16 %v140
    %v205 = vunpack.c.l.b16 %v141
    %v206 = vunpack.c.h.b16 %v141
    %v207 = vunpack.c.l.b16 %v142
    %v208 = vunpack.c.h.b16 %v142
    %v209 = vpack.c.b16 %v179, %v177
    %v210 = vpack.c.b16 %v180, %v178
    %v211 = vpack.c.b16 %v183, %v181
    %v212 = vpack.c.b16 %v184, %v182
    %v213 = vpack.c.b16 %v187, %v185
    %v214 = vpack.c.b16 %v188, %v186
    %v215 = vpack.c.b16 %v191, %v189
    %v216 = vpack.c.b16 %v192, %v190
    %v217 = vpack.c.b16 %v195, %v193
    %v218 = vpack.c.b16 %v196, %v194
    %v219 = vpack.c.b16 %v199, %v197
    %v220 = vpack.c.b16 %v200, %v198
    %v221 = vpack.c.b16 %v203, %v201
    %v222 = vpack.c.b16 %v204, %v202
    %v223 = vpack.c.b16 %v207, %v205
    %v224 = vpack.c.b16 %v208, %v206
    %241 = vmatprep.subr.bf16.mxu0 %v210
    %242 = vmatpush1.bf16.msra.mxu0 %v209
    %243 = vmatprep.subr.bf16.mxu0 %v212
    %244 = vmatpush1.bf16.msra.mxu0 %v211
    %245 = vmatprep.subr.bf16.mxu0 %v214
    %246 = vmatpush1.bf16.msra.mxu0 %v213
    %247 = vmatprep.subr.bf16.mxu0 %v216
    %248 = vmatpush1.bf16.msra.mxu0 %v215
    %249 = vmatprep.subr.bf16.mxu0 %v218
    %250 = vmatpush1.bf16.msra.mxu0 %v217
    %251 = vmatprep.subr.bf16.mxu0 %v220
    %252 = vmatpush1.bf16.msra.mxu0 %v219
    %253 = vmatprep.subr.bf16.mxu0 %v222
    %254 = vmatpush1.bf16.msra.mxu0 %v221
    %255 = vmatprep.subr.bf16.mxu0 %v224
    %256 = vmatpush1.bf16.msra.mxu0 %v223
    %257 = vmatprep.subr.bf16.mxu0 0
    %258 = vmatpush1.bf16.msra.mxu0 0
    %259 = vmatprep.subr.bf16.mxu0 0
    %260 = vmatpush1.bf16.msra.mxu0 0
    %261 = vmatprep.subr.bf16.mxu0 0
    %262 = vmatpush1.bf16.msra.mxu0 0
    %263 = vmatprep.subr.bf16.mxu0 0
    %264 = vmatpush1.bf16.msra.mxu0 0
    %265 = vmatprep.subr.bf16.mxu0 0
    %266 = vmatpush1.bf16.msra.mxu0 0
    %267 = vmatprep.subr.bf16.mxu0 0
    %268 = vmatpush1.bf16.msra.mxu0 0
    %269 = vmatprep.subr.bf16.mxu0 0
    %270 = vmatpush1.bf16.msra.mxu0 0
    %271 = vmatprep.subr.bf16.mxu0 0
    %272 = vmatpush1.bf16.msra.mxu0 0
    %273 = vmatprep.mubr.bf16.mxu0 0
    %274 = vmatmul.mubr.bf16.gmra.mrb[0].mxu0 %v159
    %v275 = vpop.f32.mrb[0].mxu0
    %v276 = vadd.f32 %v148, %v275
    %v277 = vpop.f32.mrb[0].mxu0
    %v278 = vadd.f32 %v152, %v277
    %v279 = vpop.f32.mrb[0].mxu0
    %v280 = vadd.f32 %v148, %v279
    %v281 = vpop.f32.mrb[0].mxu0
    %v282 = vadd.f32 %v152, %v281
    %283 = vdwg.mxu0
    %284 = vadd.xlane.f32.xlu0 %v276
    %v285 = vpop.xlane.xlu0 %284
    %286 = vadd.xlane.f32.xlu0 %v280
    %v287 = vpop.xlane.xlu0 %286
    %v288 = vmul.f32 %v285, 0.0625
    %v289 = vmul.f32 %v287, 0.0625
    %v290 = vmul.f32 %v276, %v276
    %v291 = vmul.f32 %v280, %v280
    %292 = vadd.xlane.f32.xlu0 %v290
    %v293 = vpop.xlane.xlu0 %292
    %294 = vadd.xlane.f32.xlu0 %v291
    %v295 = vpop.xlane.xlu0 %294
    %v296 = vmul.f32 %v293, 0.0625
    %v297 = vmul.f32 %v295, 0.0625
    %v298 = vmul.f32 %v288, %v288
    %v299 = vmul.f32 %v289, %v289
    %v300 = vsub.f32 %v296, %v298
    %v301 = vsub.f32 %v297, %v299
    %v302 = vsub.f32 %v276, %v288
    %v303 = vsub.f32 %v280, %v289
    %v304 = vadd.f32 %v300, 1e-05
    %v305 = vadd.f32 %v301, 1e-05
    %v306 = vrsqrt.pop %v304
    %v307 = vrsqrt.pop %v305
    %v308 = vmul.f32 %v302, %v306
    %v309 = vmul.f32 %v303, %v307
    %v310 = vmax.f32 %v308, 0.0
    %v311 = vmax.f32 %v309, 0.0
    %312 = vadd.xlane.f32.xlu0 %v278
    %v313 = vpop.xlane.xlu0 %312
    %314 = vadd.xlane.f32.xlu0 %v282
    %v315 = vpop.xlane.xlu0 %314
    %v316 = vmul.f32 %v313, 0.0625
    %v317 = vmul.f32 %v315, 0.0625
    %v318 = vmul.f32 %v278, %v278
    %v319 = vmul.f32 %v282, %v282
    %320 = vadd.xlane.f32.xlu0 %v318
    %v321 = vpop.xlane.xlu0 %320
    %322 = vadd.xlane.f32.xlu0 %v319
    %v323 = vpop.xlane.xlu0 %322
    %v324 = vmul.f32 %v321, 0.0625
    %v325 = vmul.f32 %v323, 0.0625
    %v326 = vmul.f32 %v316, %v316
    %v327 = vmul.f32 %v317, %v317
    %v328 = vsub.f32 %v324, %v326
    %v329 = vsub.f32 %v325, %v327
    %v330 = vsub.f32 %v278, %v316
    %v331 = vsub.f32 %v282, %v317
    %v332 = vadd.f32 %v328, 1e-05
    %v333 = vadd.f32 %v329, 1e-05
    %v334 = vrsqrt.pop %v332
    %v335 = vrsqrt.pop %v333
    %v336 = vmul.f32 %v330, %v334
    %v337 = vmul.f32 %v331, %v335
    %v338 = vmax.f32 %v336, 0.0
    %v339 = vmax.f32 %v337, 0.0
    %v340 = vmul.f32 %v338, 1.442695
    %v341 = vpow.pop %v340
    %v342 = vmul.f32 %v339, 1.442695
    %v343 = vpow.pop %v342
    %v344 = vadd.f32 %v341, 0.0001
    %v345 = vadd.f32 %v343, 0.0001
    %v346 = vrsqrt.pop %v344
    %v347 = vmul.f32 %v344, %v346
    %vm348 = vcmp.eq.f32.partialorder %v344, inf
    %v349 = vsel %vm348, %v344, %v347
    %vm350 = vcmp.eq.f32.partialorder %v344, 0.0
    %v351 = vand.u32 %v344, 2147483648
    %v352 = vsel %vm350, %v351, %v349
    %v353 = vrsqrt.pop %v345
    %v354 = vmul.f32 %v345, %v353
    %vm355 = vcmp.eq.f32.partialorder %v345, inf
    %v356 = vsel %vm355, %v345, %v354
    %vm357 = vcmp.eq.f32.partialorder %v345, 0.0
    %v358 = vand.u32 %v345, 2147483648
    %v359 = vsel %vm357, %v358, %v356
    %v360 = vld [vmem:[#allocation5] sm:$0xf]
    %v361 = vld [vmem:[#allocation5 + $0x4] sm:$0xf]
    %v362 = vunpack.c.l.bf16 %v360
    %v363 = vunpack.c.l.bf16 %v361
    %v364 = vmul.f32 %v352, %v362
    %v365 = vmul.f32 %v359, %v363
    %v366 = vadd.f32 %v310, %v364
    %v367 = vadd.f32 %v311, %v365
    %v368 = vpack.c.bf16 %v367, %v366
    %v369 = vld [vmem:[#allocation8] sm:$0xf]
    %v370 = vld [vmem:[#allocation8 + $0x4] sm:$0xf]
    %v371 = vld [vmem:[#allocation8 + $0x8] sm:$0xf]
    %v372 = vld [vmem:[#allocation8 + $0xc] sm:$0xf]
    %v373 = vld [vmem:[#allocation8 + $0x10] sm:$0xf]
    %v374 = vld [vmem:[#allocation8 + $0x14] sm:$0xf]
    %v375 = vld [vmem:[#allocation8 + $0x18] sm:$0xf]
    %v376 = vld [vmem:[#allocation8 + $0x1c] sm:$0xf]
    %v377 = vld [vmem:[#allocation8 + $0x20] sm:$0xf]
    %v378 = vld [vmem:[#allocation8 + $0x24] sm:$0xf]
    %v379 = vld [vmem:[#allocation8 + $0x28] sm:$0xf]
    %v380 = vld [vmem:[#allocation8 + $0x2c] sm:$0xf]
    %v381 = vld [vmem:[#allocation8 + $0x30] sm:$0xf]
    %v382 = vld [vmem:[#allocation8 + $0x34] sm:$0xf]
    %v383 = vld [vmem:[#allocation8 + $0x38] sm:$0xf]
    %v384 = vld [vmem:[#allocation8 + $0x3c] sm:$0xf]
    %v385 = vld [vmem:[%s5] sm:$0x1]
    %v387 = vlaneseq
    %v388 = vshrl.u32 %v387, 7
    %v389 = vsub.s32 0, %v388
    %v390 = vrot.slane %v385, %v389
    %v408 = vunpack.c.l.b16 %v369
    %v409 = vunpack.c.l.b16 %v370
    %v410 = vunpack.c.l.b16 %v371
    %v411 = vunpack.c.l.b16 %v372
    %v412 = vunpack.c.l.b16 %v373
    %v413 = vunpack.c.l.b16 %v374
    %v414 = vunpack.c.l.b16 %v375
    %v415 = vunpack.c.l.b16 %v376
    %v416 = vunpack.c.l.b16 %v377
    %v417 = vunpack.c.l.b16 %v378
    %v418 = vunpack.c.l.b16 %v379
    %v419 = vunpack.c.l.b16 %v380
    %v420 = vunpack.c.l.b16 %v381
    %v421 = vunpack.c.l.b16 %v382
    %v422 = vunpack.c.l.b16 %v383
    %v423 = vunpack.c.l.b16 %v384
    %v424 = vpack.c.b16 %v409, %v408
    %v425 = vpack.c.b16 %v411, %v410
    %v426 = vpack.c.b16 %v413, %v412
    %v427 = vpack.c.b16 %v415, %v414
    %v428 = vpack.c.b16 %v417, %v416
    %v429 = vpack.c.b16 %v419, %v418
    %v430 = vpack.c.b16 %v421, %v420
    %v431 = vpack.c.b16 %v423, %v422
    %440 = vmatprep.subr.bf16.mxu0 0
    %441 = vmatpush1.bf16.msra.mxu0 %v424
    %442 = vmatprep.subr.bf16.mxu0 0
    %443 = vmatpush1.bf16.msra.mxu0 %v425
    %444 = vmatprep.subr.bf16.mxu0 0
    %445 = vmatpush1.bf16.msra.mxu0 %v426
    %446 = vmatprep.subr.bf16.mxu0 0
    %447 = vmatpush1.bf16.msra.mxu0 %v427
    %448 = vmatprep.subr.bf16.mxu0 0
    %449 = vmatpush1.bf16.msra.mxu0 %v428
    %450 = vmatprep.subr.bf16.mxu0 0
    %451 = vmatpush1.bf16.msra.mxu0 %v429
    %452 = vmatprep.subr.bf16.mxu0 0
    %453 = vmatpush1.bf16.msra.mxu0 %v430
    %454 = vmatprep.subr.bf16.mxu0 0
    %455 = vmatpush1.bf16.msra.mxu0 %v431
    %456 = vmatprep.subr.bf16.mxu0 0
    %457 = vmatpush1.bf16.msra.mxu0 0
    %458 = vmatprep.subr.bf16.mxu0 0
    %459 = vmatpush1.bf16.msra.mxu0 0
    %460 = vmatprep.subr.bf16.mxu0 0
    %461 = vmatpush1.bf16.msra.mxu0 0
    %462 = vmatprep.subr.bf16.mxu0 0
    %463 = vmatpush1.bf16.msra.mxu0 0
    %464 = vmatprep.subr.bf16.mxu0 0
    %465 = vmatpush1.bf16.msra.mxu0 0
    %466 = vmatprep.subr.bf16.mxu0 0
    %467 = vmatpush1.bf16.msra.mxu0 0
    %468 = vmatprep.subr.bf16.mxu0 0
    %469 = vmatpush1.bf16.msra.mxu0 0
    %470 = vmatprep.subr.bf16.mxu0 0
    %471 = vmatpush1.bf16.msra.mxu0 0
    %472 = vmatprep.mubr.bf16.mxu0 0
    %473 = vmatmul.mubr.bf16.gmra.mrb[0].mxu0 %v368
    %v474 = vpop.f32.mrb[0].mxu0
    %v475 = vadd.f32 %v390, %v474
    %v476 = vpop.f32.mrb[0].mxu0
    %v477 = vpop.f32.mrb[0].mxu0
    %v478 = vadd.f32 %v390, %v477
    %v479 = vpop.f32.mrb[0].mxu0
    %480 = vdwg.mxu0
    %481 = vadd.xlane.f32.xlu0 %v475
    %v482 = vpop.xlane.xlu0 %481
    %483 = vadd.xlane.f32.xlu0 %v478
    %v484 = vpop.xlane.xlu0 %483
    %v485 = vmul.f32 %v482, 0.03125
    %v486 = vmul.f32 %v484, 0.03125
    %v487 = vmul.f32 %v475, %v475
    %v488 = vmul.f32 %v478, %v478
    %489 = vadd.xlane.f32.xlu0 %v487
    %v490 = vpop.xlane.xlu0 %489
    %491 = vadd.xlane.f32.xlu0 %v488
    %v492 = vpop.xlane.xlu0 %491
    %v493 = vmul.f32 %v490, 0.03125
    %v494 = vmul.f32 %v492, 0.03125
    %v495 = vmul.f32 %v485, %v485
    %v496 = vmul.f32 %v486, %v486
    %v497 = vsub.f32 %v493, %v495
    %v498 = vsub.f32 %v494, %v496
    %v499 = vsub.f32 %v475, %v485
    %v500 = vsub.f32 %v478, %v486
    %v501 = vadd.f32 %v497, 1e-05
    %v502 = vadd.f32 %v498, 1e-05
    %v503 = vrsqrt.pop %v501
    %v504 = vrsqrt.pop %v502
    %v505 = vmul.f32 %v499, %v503
    %v506 = vmul.f32 %v500, %v504
    %v507 = vmax.f32 %v505, 0.0
    %v508 = vmax.f32 %v506, 0.0
    %v509 = vpack.c.bf16 %v508, %v507
    %v510 = vld [vmem:[#allocation10] sm:$0xf]
    %v511 = vld [vmem:[#allocation10 + $0x4] sm:$0xf]
    %v512 = vld [vmem:[#allocation10 + $0x8] sm:$0xf]
    %v513 = vld [vmem:[#allocation10 + $0xc] sm:$0xf]
    %v514 = vld [vmem:[#allocation10 + $0x10] sm:$0xf]
    %v515 = vld [vmem:[#allocation10 + $0x14] sm:$0xf]
    %v516 = vld [vmem:[#allocation10 + $0x18] sm:$0xf]
    %v517 = vld [vmem:[#allocation10 + $0x1c] sm:$0xf]
    %v518 = vld [vmem:[#allocation10 + $0x20] sm:$0xf]
    %v519 = vld [vmem:[#allocation10 + $0x24] sm:$0xf]
    %v520 = vld [vmem:[#allocation10 + $0x28] sm:$0xf]
    %v521 = vld [vmem:[#allocation10 + $0x2c] sm:$0xf]
    %v522 = vld [vmem:[#allocation10 + $0x30] sm:$0xf]
    %v523 = vld [vmem:[#allocation10 + $0x34] sm:$0xf]
    %v524 = vld [vmem:[#allocation10 + $0x38] sm:$0xf]
    %v525 = vld [vmem:[#allocation10 + $0x3c] sm:$0xf]
    %v526 = vld [vmem:[%s7] sm:$0x1]
    %v528 = vlaneseq
    %v529 = vshrl.u32 %v528, 7
    %v530 = vsub.s32 0, %v529
    %v531 = vrot.slane %v526, %v530
    %v549 = vunpack.c.l.b16 %v510
    %v550 = vunpack.c.l.b16 %v511
    %v551 = vunpack.c.l.b16 %v512
    %v552 = vunpack.c.l.b16 %v513
    %v553 = vunpack.c.l.b16 %v514
    %v554 = vunpack.c.l.b16 %v515
    %v555 = vunpack.c.l.b16 %v516
    %v556 = vunpack.c.l.b16 %v517
    %v557 = vunpack.c.l.b16 %v518
    %v558 = vunpack.c.l.b16 %v519
    %v559 = vunpack.c.l.b16 %v520
    %v560 = vunpack.c.l.b16 %v521
    %v561 = vunpack.c.l.b16 %v522
    %v562 = vunpack.c.l.b16 %v523
    %v563 = vunpack.c.l.b16 %v524
    %v564 = vunpack.c.l.b16 %v525
    %v565 = vpack.c.b16 %v550, %v549
    %v566 = vpack.c.b16 %v552, %v551
    %v567 = vpack.c.b16 %v554, %v553
    %v568 = vpack.c.b16 %v556, %v555
    %v569 = vpack.c.b16 %v558, %v557
    %v570 = vpack.c.b16 %v560, %v559
    %v571 = vpack.c.b16 %v562, %v561
    %v572 = vpack.c.b16 %v564, %v563
    %581 = vmatprep.subr.bf16.mxu0 0
    %582 = vmatpush1.bf16.msra.mxu0 %v565
    %583 = vmatprep.subr.bf16.mxu0 0
    %584 = vmatpush1.bf16.msra.mxu0 %v566
    %585 = vmatprep.subr.bf16.mxu0 0
    %586 = vmatpush1.bf16.msra.mxu0 %v567
    %587 = vmatprep.subr.bf16.mxu0 0
    %588 = vmatpush1.bf16.msra.mxu0 %v568
    %589 = vmatprep.subr.bf16.mxu0 0
    %590 = vmatpush1.bf16.msra.mxu0 %v569
    %591 = vmatprep.subr.bf16.mxu0 0
    %592 = vmatpush1.bf16.msra.mxu0 %v570
    %593 = vmatprep.subr.bf16.mxu0 0
    %594 = vmatpush1.bf16.msra.mxu0 %v571
    %595 = vmatprep.subr.bf16.mxu0 0
    %596 = vmatpush1.bf16.msra.mxu0 %v572
    %597 = vmatprep.subr.bf16.mxu0 0
    %598 = vmatpush1.bf16.msra.mxu0 0
    %599 = vmatprep.subr.bf16.mxu0 0
    %600 = vmatpush1.bf16.msra.mxu0 0
    %601 = vmatprep.subr.bf16.mxu0 0
    %602 = vmatpush1.bf16.msra.mxu0 0
    %603 = vmatprep.subr.bf16.mxu0 0
    %604 = vmatpush1.bf16.msra.mxu0 0
    %605 = vmatprep.subr.bf16.mxu0 0
    %606 = vmatpush1.bf16.msra.mxu0 0
    %607 = vmatprep.subr.bf16.mxu0 0
    %608 = vmatpush1.bf16.msra.mxu0 0
    %609 = vmatprep.subr.bf16.mxu0 0
    %610 = vmatpush1.bf16.msra.mxu0 0
    %611 = vmatprep.subr.bf16.mxu0 0
    %612 = vmatpush1.bf16.msra.mxu0 0
    %613 = vmatprep.mubr.bf16.mxu0 0
    %614 = vmatmul.mubr.bf16.gmra.mrb[0].mxu0 %v509
    %v615 = vpop.f32.mrb[0].mxu0
    %v616 = vadd.f32 %v531, %v615
    %v617 = vpop.f32.mrb[0].mxu0
    %v618 = vpop.f32.mrb[0].mxu0
    %v619 = vadd.f32 %v531, %v618
    %v620 = vpop.f32.mrb[0].mxu0
    %621 = vdwg.mxu0
    %622 = vadd.xlane.f32.xlu0 %v616
    %v623 = vpop.xlane.xlu0 %622
    %624 = vadd.xlane.f32.xlu0 %v619
    %v625 = vpop.xlane.xlu0 %624
    %v626 = vmul.f32 %v623, 0.03125
    %v627 = vmul.f32 %v625, 0.03125
    %v628 = vmul.f32 %v616, %v616
    %v629 = vmul.f32 %v619, %v619
    %630 = vadd.xlane.f32.xlu0 %v628
    %v631 = vpop.xlane.xlu0 %630
    %632 = vadd.xlane.f32.xlu0 %v629
    %v633 = vpop.xlane.xlu0 %632
    %v634 = vmul.f32 %v631, 0.03125
    %v635 = vmul.f32 %v633, 0.03125
    %v636 = vmul.f32 %v626, %v626
    %v637 = vmul.f32 %v627, %v627
    %v638 = vsub.f32 %v634, %v636
    %v639 = vsub.f32 %v635, %v637
    %v640 = vsub.f32 %v616, %v626
    %v641 = vsub.f32 %v619, %v627
    %v642 = vadd.f32 %v638, 1e-05
    %v643 = vadd.f32 %v639, 1e-05
    %v644 = vrsqrt.pop %v642
    %v645 = vrsqrt.pop %v643
    %v646 = vmul.f32 %v640, %v644
    %v647 = vmul.f32 %v641, %v645
    %v648 = vmax.f32 %v646, 0.0
    %v649 = vmax.f32 %v647, 0.0
    %v650 = vpack.c.bf16 %v649, %v648
    %v651 = vld [vmem:[#allocation11] sm:$0xf]
    %v652 = vld [vmem:[#allocation11 + $0x4] sm:$0xf]
    %v653 = vld [vmem:[#allocation11 + $0x8] sm:$0xf]
    %v654 = vld [vmem:[#allocation11 + $0xc] sm:$0xf]
    %v655 = vld [vmem:[#allocation11 + $0x10] sm:$0xf]
    %v656 = vld [vmem:[#allocation11 + $0x14] sm:$0xf]
    %v657 = vld [vmem:[#allocation11 + $0x18] sm:$0xf]
    %v658 = vld [vmem:[#allocation11 + $0x1c] sm:$0xf]
    %v659 = vld [vmem:[#allocation11 + $0x20] sm:$0xf]
    %v660 = vld [vmem:[#allocation11 + $0x24] sm:$0xf]
    %v661 = vld [vmem:[#allocation11 + $0x28] sm:$0xf]
    %v662 = vld [vmem:[#allocation11 + $0x2c] sm:$0xf]
    %v663 = vld [vmem:[#allocation11 + $0x30] sm:$0xf]
    %v664 = vld [vmem:[#allocation11 + $0x34] sm:$0xf]
    %v665 = vld [vmem:[#allocation11 + $0x38] sm:$0xf]
    %v666 = vld [vmem:[#allocation11 + $0x3c] sm:$0xf]
    %v667 = vld [vmem:[%s9] sm:$0x1]
    %v669 = vlaneseq
    %v670 = vshrl.u32 %v669, 7
    %v671 = vsub.s32 0, %v670
    %v672 = vrot.slane %v667, %v671
    %v690 = vunpack.c.l.b16 %v651
    %v691 = vunpack.c.l.b16 %v652
    %v692 = vunpack.c.l.b16 %v653
    %v693 = vunpack.c.l.b16 %v654
    %v694 = vunpack.c.l.b16 %v655
    %v695 = vunpack.c.l.b16 %v656
    %v696 = vunpack.c.l.b16 %v657
    %v697 = vunpack.c.l.b16 %v658
    %v698 = vunpack.c.l.b16 %v659
    %v699 = vunpack.c.l.b16 %v660
    %v700 = vunpack.c.l.b16 %v661
    %v701 = vunpack.c.l.b16 %v662
    %v702 = vunpack.c.l.b16 %v663
    %v703 = vunpack.c.l.b16 %v664
    %v704 = vunpack.c.l.b16 %v665
    %v705 = vunpack.c.l.b16 %v666
    %v706 = vpack.c.b16 %v691, %v690
    %v707 = vpack.c.b16 %v693, %v692
    %v708 = vpack.c.b16 %v695, %v694
    %v709 = vpack.c.b16 %v697, %v696
    %v710 = vpack.c.b16 %v699, %v698
    %v711 = vpack.c.b16 %v701, %v700
    %v712 = vpack.c.b16 %v703, %v702
    %v713 = vpack.c.b16 %v705, %v704
    %722 = vmatprep.subr.bf16.mxu0 0
    %723 = vmatpush1.bf16.msra.mxu0 %v706
    %724 = vmatprep.subr.bf16.mxu0 0
    %725 = vmatpush1.bf16.msra.mxu0 %v707
    %726 = vmatprep.subr.bf16.mxu0 0
    %727 = vmatpush1.bf16.msra.mxu0 %v708
    %728 = vmatprep.subr.bf16.mxu0 0
    %729 = vmatpush1.bf16.msra.mxu0 %v709
    %730 = vmatprep.subr.bf16.mxu0 0
    %731 = vmatpush1.bf16.msra.mxu0 %v710
    %732 = vmatprep.subr.bf16.mxu0 0
    %733 = vmatpush1.bf16.msra.mxu0 %v711
    %734 = vmatprep.subr.bf16.mxu0 0
    %735 = vmatpush1.bf16.msra.mxu0 %v712
    %736 = vmatprep.subr.bf16.mxu0 0
    %737 = vmatpush1.bf16.msra.mxu0 %v713
    %738 = vmatprep.subr.bf16.mxu0 0
    %739 = vmatpush1.bf16.msra.mxu0 0
    %740 = vmatprep.subr.bf16.mxu0 0
    %741 = vmatpush1.bf16.msra.mxu0 0
    %742 = vmatprep.subr.bf16.mxu0 0
    %743 = vmatpush1.bf16.msra.mxu0 0
    %744 = vmatprep.subr.bf16.mxu0 0
    %745 = vmatpush1.bf16.msra.mxu0 0
    %746 = vmatprep.subr.bf16.mxu0 0
    %747 = vmatpush1.bf16.msra.mxu0 0
    %748 = vmatprep.subr.bf16.mxu0 0
    %749 = vmatpush1.bf16.msra.mxu0 0
    %750 = vmatprep.subr.bf16.mxu0 0
    %751 = vmatpush1.bf16.msra.mxu0 0
    %752 = vmatprep.subr.bf16.mxu0 0
    %753 = vmatpush1.bf16.msra.mxu0 0
    %754 = vmatprep.mubr.bf16.mxu0 0
    %755 = vmatmul.mubr.bf16.gmra.mrb[0].mxu0 %v650
    %v756 = vpop.f32.mrb[0].mxu0
    %v757 = vadd.f32 %v672, %v756
    %v758 = vpop.f32.mrb[0].mxu0
    %v759 = vpop.f32.mrb[0].mxu0
    %v760 = vadd.f32 %v672, %v759
    %v761 = vpop.f32.mrb[0].mxu0
    %762 = vdwg.mxu0
    %763 = vst [vmem:[#allocation13] sm:$0xff] %v757
    %764 = vst [vmem:[#allocation13 + $0x8] sm:$0xff] %v760
    %v766 = vunpack.c.l.b16 %v368
    %v767 = vunpack.c.h.b16 %v368
    %v768 = vpack.c.b16 %v766, %v766
    %v769 = vpack.c.b16 %v767, %v767
    %772 = vst [vmem:[#allocation14] sm:$0xf] %v768
    %773 = vst [vmem:[#allocation14 + $0x4] sm:$0xf] %v769
    %v774 = vpack.c.bf16 %v311, %v310
    %v776 = vunpack.c.l.b16 %v774
    %v777 = vunpack.c.h.b16 %v774
    %v778 = vpack.c.b16 %v776, %v776
    %v779 = vpack.c.b16 %v777, %v777
    %782 = vst [vmem:[#allocation16] sm:$0xf] %v778
    %783 = vst [vmem:[#allocation16 + $0x4] sm:$0xf] %v779
    %v784 = vpack.c.bf16 %v359, %v352
    %v786 = vunpack.c.l.b16 %v784
    %v787 = vunpack.c.h.b16 %v784
    %v788 = vpack.c.b16 %v786, %v786
    %v789 = vpack.c.b16 %v787, %v787
    %792 = vst [vmem:[#allocation17] sm:$0xf] %v788
    %793 = vst [vmem:[#allocation17 + $0x4] sm:$0xf] %v789
    // Predicated region
    $region66: #{tpu_custom_call.1} parent=1 // pred_check
      _
    $region67: #{tpu_custom_call.1} parent=1 // pred_check_branch
      %795 = sbr.rel (0) target = $region69
    $region68: #{tpu_custom_call.1} parent=1 // pred_region
      %s797 = ssub.s32 256, 256
      %798 = vsyncadd [#allocation4], %s797
      %s799 = sshll.u32 [#allocation13], 4
      %s800 = int_to_ptr.vmem [resolvable:$true] %s799
      %805 = dma.vmem_to_hbm [thread:$0]  %s800, 256, %s10, [#allocation4], 128, 128, 8
    $region69: #{tpu_custom_call.1} parent=1 // pred_fallthru
      _
    // Predicated region
    $region70: #{tpu_custom_call.1} parent=1 // pred_check
      _
    $region71: #{tpu_custom_call.1} parent=1 // pred_check_branch
      %807 = sbr.rel (0) target = $region73
    $region72: #{tpu_custom_call.1} parent=1 // pred_region
      %s809 = ssub.s32 128, 128
      %810 = vsyncadd [#allocation15], %s809
      %s811 = sshll.u32 [#allocation14], 4
      %s812 = int_to_ptr.vmem [resolvable:$true] %s811
      %817 = dma.vmem_to_hbm [thread:$0]  %s812, 128, %s11, [#allocation15], 64, 64, 4
    $region73: #{tpu_custom_call.1} parent=1 // pred_fallthru
      _
    // Predicated region
    $region74: #{tpu_custom_call.1} parent=1 // pred_check
      _
    $region75: #{tpu_custom_call.1} parent=1 // pred_check_branch
      %819 = sbr.rel (0) target = $region77
    $region76: #{tpu_custom_call.1} parent=1 // pred_region
      %s821 = ssub.s32 128, 128
      %822 = vsyncadd [#allocation15], %s821
      %s823 = sshll.u32 [#allocation16], 4
      %s824 = int_to_ptr.vmem [resolvable:$true] %s823
      %829 = dma.vmem_to_hbm [thread:$0]  %s824, 128, %s12, [#allocation15], 64, 64, 4
    $region77: #{tpu_custom_call.1} parent=1 // pred_fallthru
      _
    // Predicated region
    $region78: #{tpu_custom_call.1} parent=1 // pred_check
      _
    $region79: #{tpu_custom_call.1} parent=1 // pred_check_branch
      %831 = sbr.rel (0) target = $region81
    $region80: #{tpu_custom_call.1} parent=1 // pred_region
      %s833 = ssub.s32 128, 128
      %834 = vsyncadd [#allocation18], %s833
      %s835 = sshll.u32 [#allocation17], 4
      %s836 = int_to_ptr.vmem [resolvable:$true] %s835
      %841 = dma.vmem_to_hbm [thread:$0]  %s836, 128, %s13, [#allocation18], 64, 64, 4
    $region81: #{tpu_custom_call.1} parent=1 // pred_fallthru
      _
    // Predicated region
    $region82: #{tpu_custom_call.1} parent=1 // pred_check
      _
    $region83: #{tpu_custom_call.1} parent=1 // pred_check_branch
      %843 = sbr.rel (0) target = $region85
    $region84: #{tpu_custom_call.1} parent=1 // pred_region
      %844 = dma.done [#allocation4], 256
    $region85: #{tpu_custom_call.1} parent=1 // pred_fallthru
      _
    // Predicated region
    $region86: #{tpu_custom_call.1} parent=1 // pred_check
      _
    $region87: #{tpu_custom_call.1} parent=1 // pred_check_branch
      %846 = sbr.rel (0) target = $region89
    $region88: #{tpu_custom_call.1} parent=1 // pred_region
      %847 = dma.done [#allocation15], 128
    $region89: #{tpu_custom_call.1} parent=1 // pred_fallthru
      _
    // Predicated region
    $region90: #{tpu_custom_call.1} parent=1 // pred_check
      _
    $region91: #{tpu_custom_call.1} parent=1 // pred_check_branch
      %849 = sbr.rel (0) target = $region93
    $region92: #{tpu_custom_call.1} parent=1 // pred_region
      %850 = dma.done [#allocation15], 128
    $region93: #{tpu_custom_call.1} parent=1 // pred_fallthru
      _
    // Predicated region
    $region94: #{tpu_custom_call.1} parent=1 // pred_check
      _
    $region95: #{tpu_custom_call.1} parent=1 // pred_check_branch
      %852 = sbr.rel (0) target = $region97
    $region96: #{tpu_custom_call.1} parent=1 // pred_region
      %853 = dma.done [#allocation18], 128
    $region97: #{tpu_custom_call.1} parent=1 // pred_fallthru
      _
    %854 = vsyncpa [#allocation3], 1
    %855 = vsyncpa [#allocation6], 1
    %856 = vsyncpa [#allocation9], 1
    %857 = vsyncpa [#allocation12], 1
    %858 = vsyncpa [#allocation4], 1
    %859 = vsyncpa [#allocation15], 1
    %860 = vsyncpa [#allocation18], 1

// kernel: tpu_custom_call.1
$region0: #{tpu_custom_call.1}
  #allocation0 [shape = 'u32[]', space=smem, size = 0x4, offset = 0x4, fixed_abs, tag = 'smem constant byte address 0x4 - core index']
  #allocation1 [shape = 'u32[144,128]{1,0:T(1,128)}', space=vmem, size = 0x12000, scoped, tag = 'internal scratch']
  %s0 = inlined_call_operand.hbm [shape: bf16[16,128], index: 0, kind: input, shape index: {}]
  %s1 = inlined_call_operand.hbm [shape: bf16[16,128], index: 1, kind: input, shape index: {}]
  %s2 = inlined_call_operand.hbm [shape: bf16[128,256], index: 2, kind: input, shape index: {}]
  %s3 = inlined_call_operand.vmem [shape: f32[1,256], index: 3, kind: input, shape index: {}]
  %s4 = inlined_call_operand.hbm [shape: bf16[128,128], index: 4, kind: input, shape index: {}]
  %s5 = inlined_call_operand.vmem [shape: f32[1,128], index: 5, kind: input, shape index: {}]
  %s6 = inlined_call_operand.hbm [shape: bf16[1,128,128], index: 6, kind: input, shape index: {}]
  %s7 = inlined_call_operand.vmem [shape: f32[1,1,128], index: 7, kind: input, shape index: {}]
  %s8 = inlined_call_operand.hbm [shape: bf16[128,128], index: 8, kind: input, shape index: {}]
  %s9 = inlined_call_operand.vmem [shape: f32[1,128], index: 9, kind: input, shape index: {}]
  %s10 = inlined_call_operand.hbm [shape: f32[16,128], index: 10, kind: output, shape index: {0}]
  %s11 = inlined_call_operand.hbm [shape: bf16[16,128], index: 11, kind: output, shape index: {1}]
  %s12 = inlined_call_operand.hbm [shape: bf16[16,128], index: 12, kind: output, shape index: {2}]
  %s13 = inlined_call_operand.hbm [shape: bf16[16,128], index: 13, kind: output, shape index: {3}]
  %14 = xla_tuple %s10, %s11, %s12, %s13
  %s15 = sld [smem:[#allocation0]]
  $region98: #{tpu_custom_call.1} parent=0
    _
  %s17 = ssub.s32 1, %s15
  %s18 = scalar_select 0, %s17, %s15
  $region1: #{tpu_custom_call.1} parent=0
    #allocation2 [shape = 'u8[4096]{0}', space=vmem, size = 0x1000, scoped, tag = 'input window, operand 0, single buffered']
    #allocation3 [shape = 's32[1]{0}', space=sflag, size = 0x4, scoped, tag = 'scoped memory for tpu_custom_call.1']
    #allocation4 [shape = 's32[1]{0}', space=sflag, size = 0x4, scoped, tag = 'scoped memory for tpu_custom_call.1']
    #allocation5 [shape = 'u8[4096]{0}', space=vmem, size = 0x1000, scoped, tag = 'input window, operand 1, single buffered']
    #allocation6 [shape = 's32[1]{0}', space=sflag, size = 0x4, scoped, tag = 'scoped memory for tpu_custom_call.1']
    #allocation7 [shape = 'u8[65536]{0}', space=vmem, size = 0x10000, scoped, tag = 'input window, operand 2, single buffered']
    #allocation8 [shape = 'u8[32768]{0}', space=vmem, size = 0x8000, scoped, tag = 'input window, operand 4, single buffered']
    #allocation9 [shape = 's32[1]{0}', space=sflag, size = 0x4, scoped, tag = 'scoped memory for tpu_custom_call.1']
    #allocation10 [shape = 'u8[32768]{0}', space=vmem, size = 0x8000, scoped, tag = 'input window, operand 6, single buffered']
    #allocation11 [shape = 'u8[32768]{0}', space=vmem, size = 0x8000, scoped, tag = 'input window, operand 8, single buffered']
    #allocation12 [shape = 's32[1]{0}', space=sflag, size = 0x4, scoped, tag = 'scoped memory for tpu_custom_call.1']
    #allocation13 [shape = 'u8[8192]{0}', space=vmem, size = 0x2000, scoped, tag = 'output window, operand 0, single buffered']
    #allocation14 [shape = 'u8[4096]{0}', space=vmem, size = 0x1000, scoped, tag = 'output window, operand 1, single buffered']
    #allocation15 [shape = 's32[1]{0}', space=sflag, size = 0x4, scoped, tag = 'scoped memory for tpu_custom_call.1']
    #allocation16 [shape = 'u8[4096]{0}', space=vmem, size = 0x1000, scoped, tag = 'output window, operand 2, single buffered']
    #allocation17 [shape = 'u8[4096]{0}', space=vmem, size = 0x1000, scoped, tag = 'output window, operand 3, single buffered']
    #allocation18 [shape = 's32[1]{0}', space=sflag, size = 0x4, scoped, tag = 'scoped memory for tpu_custom_call.1']
    %19 = vsyncpa [#allocation3], 0
    %20 = vsyncpa [#allocation6], 0
    %21 = vsyncpa [#allocation9], 0
    %22 = vsyncpa [#allocation12], 0
    %23 = vsyncpa [#allocation4], 0
    %24 = vsyncpa [#allocation15], 0
    %25 = vsyncpa [#allocation18], 0
    // Predicated region
    $region2: #{tpu_custom_call.1} parent=1 // pred_check
      _
    $region3: #{tpu_custom_call.1} parent=1 // pred_check_branch
      %27 = sbr.rel (0) target = $region5
    $region4: #{tpu_custom_call.1} parent=1 // pred_region
      %s29 = ssub.s32 128, 128
      %30 = vsyncadd [#allocation3], %s29
      %s31 = sshll.u32 [#allocation2], 4
      %s32 = int_to_ptr.vmem [resolvable:$true] %s31
      %37 = dma.hbm_to_vmem [thread:$0]  %s0, 128, %s32, [#allocation3], 64, 64, 4
    $region5: #{tpu_custom_call.1} parent=1 // pred_fallthru
      _
    // Predicated region
    $region6: #{tpu_custom_call.1} parent=1 // pred_check
      _
    $region7: #{tpu_custom_call.1} parent=1 // pred_check_branch
      %39 = sbr.rel (0) target = $region9
    $region8: #{tpu_custom_call.1} parent=1 // pred_region
      %s41 = ssub.s32 128, 128
      %42 = vsyncadd [#allocation6], %s41
      %s43 = sshll.u32 [#allocation5], 4
      %s44 = int_to_ptr.vmem [resolvable:$true] %s43
      %49 = dma.hbm_to_vmem [thread:$0]  %s1, 128, %s44, [#allocation6], 64, 64, 4
    $region9: #{tpu_custom_call.1} parent=1 // pred_fallthru
      _
    // Predicated region
    $region10: #{tpu_custom_call.1} parent=1 // pred_check
      _
    $region11: #{tpu_custom_call.1} parent=1 // pred_check_branch
      %51 = sbr.rel (0) target = $region13
    $region12: #{tpu_custom_call.1} parent=1 // pred_region
      %s53 = ssub.s32 2048, 2048
      %54 = vsyncadd [#allocation6], %s53
      %s55 = sshll.u32 [#allocation7], 4
      %s56 = int_to_ptr.vmem [resolvable:$true] %s55
      %61 = dma.hbm_to_vmem [thread:$0]  %s2, 2048, %s56, [#allocation6], 128, 128, 8
    $region13: #{tpu_custom_call.1} parent=1 // pred_fallthru
      _
    // Predicated region
    $region14: #{tpu_custom_call.1} parent=1 // pred_check
      _
    $region15: #{tpu_custom_call.1} parent=1 // pred_check_branch
      %63 = sbr.rel (0) target = $region17
    $region16: #{tpu_custom_call.1} parent=1 // pred_region
      _
    $region17: #{tpu_custom_call.1} parent=1 // pred_fallthru
      _
    // Predicated region
    $region18: #{tpu_custom_call.1} parent=1 // pred_check
      _
    $region19: #{tpu_custom_call.1} parent=1 // pred_check_branch
      %65 = sbr.rel (0) target = $region21
    $region20: #{tpu_custom_call.1} parent=1 // pred_region
      %s67 = ssub.s32 1024, 1024
      %68 = vsyncadd [#allocation9], %s67
      %s69 = sshll.u32 [#allocation8], 4
      %s70 = int_to_ptr.vmem [resolvable:$true] %s69
      %75 = dma.hbm_to_vmem [thread:$0]  %s4, 1024, %s70, [#allocation9], 64, 64, 4
    $region21: #{tpu_custom_call.1} parent=1 // pred_fallthru
      _
    // Predicated region
    $region22: #{tpu_custom_call.1} parent=1 // pred_check
      _
    $region23: #{tpu_custom_call.1} parent=1 // pred_check_branch
      %77 = sbr.rel (0) target = $region25
    $region24: #{tpu_custom_call.1} parent=1 // pred_region
      _
    $region25: #{tpu_custom_call.1} parent=1 // pred_fallthru
      _
    // Predicated region
    $region26: #{tpu_custom_call.1} parent=1 // pred_check
      _
    $region27: #{tpu_custom_call.1} parent=1 // pred_check_branch
      %79 = sbr.rel (0) target = $region29
    $region28: #{tpu_custom_call.1} parent=1 // pred_region
      %s81 = ssub.s32 1024, 1024
      %82 = vsyncadd [#allocation9], %s81
      %s83 = sshll.u32 [#allocation10], 4
      %s84 = int_to_ptr.vmem [resolvable:$true] %s83
      %89 = dma.hbm_to_vmem [thread:$0]  %s6, 1024, %s84, [#allocation9], 64, 64, 4
    $region29: #{tpu_custom_call.1} parent=1 // pred_fallthru
      _
    // Predicated region
    $region30: #{tpu_custom_call.1} parent=1 // pred_check
      _
    $region31: #{tpu_custom_call.1} parent=1 // pred_check_branch
      %91 = sbr.rel (0) target = $region33
    $region32: #{tpu_custom_call.1} parent=1 // pred_region
      _
    $region33: #{tpu_custom_call.1} parent=1 // pred_fallthru
      _
    // Predicated region
    $region34: #{tpu_custom_call.1} parent=1 // pred_check
      _
    $region35: #{tpu_custom_call.1} parent=1 // pred_check_branch
      %93 = sbr.rel (0) target = $region37
    $region36: #{tpu_custom_call.1} parent=1 // pred_region
      %s95 = ssub.s32 1024, 1024
      %96 = vsyncadd [#allocation12], %s95
      %s97 = sshll.u32 [#allocation11], 4
      %s98 = int_to_ptr.vmem [resolvable:$true] %s97
      %103 = dma.hbm_to_vmem [thread:$0]  %s8, 1024, %s98, [#allocation12], 64, 64, 4
    $region37: #{tpu_custom_call.1} parent=1 // pred_fallthru
      _
    // Predicated region
    $region38: #{tpu_custom_call.1} parent=1 // pred_check
      _
    $region39: #{tpu_custom_call.1} parent=1 // pred_check_branch
      %105 = sbr.rel (0) target = $region41
    $region40: #{tpu_custom_call.1} parent=1 // pred_region
      _
    $region41: #{tpu_custom_call.1} parent=1 // pred_fallthru
      _
    // Predicated region
    $region42: #{tpu_custom_call.1} parent=1 // pred_check
      _
    $region43: #{tpu_custom_call.1} parent=1 // pred_check_branch
      %107 = sbr.rel (0) target = $region45
    $region44: #{tpu_custom_call.1} parent=1 // pred_region
      %108 = dma.done [#allocation3], 128
    $region45: #{tpu_custom_call.1} parent=1 // pred_fallthru
      _
    // Predicated region
    $region46: #{tpu_custom_call.1} parent=1 // pred_check
      _
    $region47: #{tpu_custom_call.1} parent=1 // pred_check_branch
      %110 = sbr.rel (0) target = $region49
    $region48: #{tpu_custom_call.1} parent=1 // pred_region
      %111 = dma.done [#allocation6], 128
    $region49: #{tpu_custom_call.1} parent=1 // pred_fallthru
      _
    // Predicated region
    $region50: #{tpu_custom_call.1} parent=1 // pred_check
      _
    $region51: #{tpu_custom_call.1} parent=1 // pred_check_branch
      %113 = sbr.rel (0) target = $region53
    $region52: #{tpu_custom_call.1} parent=1 // pred_region
      %114 = dma.done [#allocation6], 2048
    $region53: #{tpu_custom_call.1} parent=1 // pred_fallthru
      _
    // Predicated region
    $region54: #{tpu_custom_call.1} parent=1 // pred_check
      _
    $region55: #{tpu_custom_call.1} parent=1 // pred_check_branch
      %116 = sbr.rel (0) target = $region57
    $region56: #{tpu_custom_call.1} parent=1 // pred_region
      %117 = dma.done [#allocation9], 1024
    $region57: #{tpu_custom_call.1} parent=1 // pred_fallthru
      _
    // Predicated region
    $region58: #{tpu_custom_call.1} parent=1 // pred_check
      _
    $region59: #{tpu_custom_call.1} parent=1 // pred_check_branch
      %119 = sbr.rel (0) target = $region61
    $region60: #{tpu_custom_call.1} parent=1 // pred_region
      %120 = dma.done [#allocation9], 1024
    $region61: #{tpu_custom_call.1} parent=1 // pred_fallthru
      _
    // Predicated region
    $region62: #{tpu_custom_call.1} parent=1 // pred_check
      _
    $region63: #{tpu_custom_call.1} parent=1 // pred_check_branch
      %122 = sbr.rel (0) target = $region65
    $region64: #{tpu_custom_call.1} parent=1 // pred_region
      %123 = dma.done [#allocation12], 1024
    $region65: #{tpu_custom_call.1} parent=1 // pred_fallthru
      _
    %v125 = vld [vmem:[#allocation2] sm:$0xf]
    %v126 = vld [vmem:[#allocation2 + $0x4] sm:$0xf]
    %v127 = vld [vmem:[#allocation7] sm:$0xff]
    %v128 = vld [vmem:[#allocation7 + $0x8] sm:$0xff]
    %v129 = vld [vmem:[#allocation7 + $0x10] sm:$0xff]
    %v130 = vld [vmem:[#allocation7 + $0x18] sm:$0xff]
    %v131 = vld [vmem:[#allocation7 + $0x20] sm:$0xff]
    %v132 = vld [vmem:[#allocation7 + $0x28] sm:$0xff]
    %v133 = vld [vmem:[#allocation7 + $0x30] sm:$0xff]
    %v134 = vld [vmem:[#allocation7 + $0x38] sm:$0xff]
    %v135 = vld [vmem:[#allocation7 + $0x40] sm:$0xff]
    %v136 = vld [vmem:[#allocation7 + $0x48] sm:$0xff]
    %v137 = vld [vmem:[#allocation7 + $0x50] sm:$0xff]
    %v138 = vld [vmem:[#allocation7 + $0x58] sm:$0xff]
    %v139 = vld [vmem:[#allocation7 + $0x60] sm:$0xff]
    %v140 = vld [vmem:[#allocation7 + $0x68] sm:$0xff]
    %v141 = vld [vmem:[#allocation7 + $0x70] sm:$0xff]
    %v142 = vld [vmem:[#allocation7 + $0x78] sm:$0xff]
    %v143 = vld [vmem:[%s3] sm:$0x3]
    %v145 = vlaneseq
    %v146 = vshrl.u32 %v145, 7
    %v147 = vsub.s32 0, %v146
    %v148 = vrot.slane %v143, %v147
    %v149 = vlaneseq
    %v150 = vshrl.u32 %v149, 7
    %v151 = vsub.s32 1, %v150
    %v152 = vrot.slane %v143, %v151
    %v157 = vunpack.c.l.b16 %v125
    %v158 = vunpack.c.l.b16 %v126
    %v159 = vpack.c.b16 %v158, %v157
    %v177 = vunpack.c.l.b16 %v127
    %v178 = vunpack.c.h.b16 %v127
    %v179 = vunpack.c.l.b16 %v128
    %v180 = vunpack.c.h.b16 %v128
    %v181 = vunpack.c.l.b16 %v129
    %v182 = vunpack.c.h.b16 %v129
    %v183 = vunpack.c.l.b16 %v130
    %v184 = vunpack.c.h.b16 %v130
    %v185 = vunpack.c.l.b16 %v131
    %v186 = vunpack.c.h.b16 %v131
    %v187 = vunpack.c.l.b16 %v132
    %v188 = vunpack.c.h.b16 %v132
    %v189 = vunpack.c.l.b16 %v133
    %v190 = vunpack.c.h.b16 %v133
    %v191 = vunpack.c.l.b16 %v134
    %v192 = vunpack.c.h.b16 %v134
    %v193 = vunpack.c.l.b16 %v135
    %v194 = vunpack.c.h.b16 %v135
    %v195 = vunpack.c.l.b16 %v136
    %v196 = vunpack.c.h.b16 %v136
    %v197 = vunpack.c.l.b16 %v137
    %v198 = vunpack.c.h.b16 %v137
    %v199 = vunpack.c.l.b16 %v138
    %v200 = vunpack.c.h.b16 %v138
    %v201 = vunpack.c.l.b16 %v139
    %v202 = vunpack.c.h.b16 %v139
    %v203 = vunpack.c.l.b16 %v140
    %v204 = vunpack.c.h.b16 %v140
    %v205 = vunpack.c.l.b16 %v141
    %v206 = vunpack.c.h.b16 %v141
    %v207 = vunpack.c.l.b16 %v142
    %v208 = vunpack.c.h.b16 %v142
    %v209 = vpack.c.b16 %v179, %v177
    %v210 = vpack.c.b16 %v180, %v178
    %v211 = vpack.c.b16 %v183, %v181
    %v212 = vpack.c.b16 %v184, %v182
    %v213 = vpack.c.b16 %v187, %v185
    %v214 = vpack.c.b16 %v188, %v186
    %v215 = vpack.c.b16 %v191, %v189
    %v216 = vpack.c.b16 %v192, %v190
    %v217 = vpack.c.b16 %v195, %v193
    %v218 = vpack.c.b16 %v196, %v194
    %v219 = vpack.c.b16 %v199, %v197
    %v220 = vpack.c.b16 %v200, %v198
    %v221 = vpack.c.b16 %v203, %v201
    %v222 = vpack.c.b16 %v204, %v202
    %v223 = vpack.c.b16 %v207, %v205
    %v224 = vpack.c.b16 %v208, %v206
    %241 = vmatprep.subr.bf16.mxu0 %v210
    %242 = vmatpush1.bf16.msra.mxu0 %v209
    %243 = vmatprep.subr.bf16.mxu0 %v212
    %244 = vmatpush1.bf16.msra.mxu0 %v211
    %245 = vmatprep.subr.bf16.mxu0 %v214
    %246 = vmatpush1.bf16.msra.mxu0 %v213
    %247 = vmatprep.subr.bf16.mxu0 %v216
    %248 = vmatpush1.bf16.msra.mxu0 %v215
    %249 = vmatprep.subr.bf16.mxu0 %v218
    %250 = vmatpush1.bf16.msra.mxu0 %v217
    %251 = vmatprep.subr.bf16.mxu0 %v220
    %252 = vmatpush1.bf16.msra.mxu0 %v219
    %253 = vmatprep.subr.bf16.mxu0 %v222
    %254 = vmatpush1.bf16.msra.mxu0 %v221
    %255 = vmatprep.subr.bf16.mxu0 %v224
    %256 = vmatpush1.bf16.msra.mxu0 %v223
    %257 = vmatprep.subr.bf16.mxu0 0
    %258 = vmatpush1.bf16.msra.mxu0 0
    %259 = vmatprep.subr.bf16.mxu0 0
    %260 = vmatpush1.bf16.msra.mxu0 0
    %261 = vmatprep.subr.bf16.mxu0 0
    %262 = vmatpush1.bf16.msra.mxu0 0
    %263 = vmatprep.subr.bf16.mxu0 0
    %264 = vmatpush1.bf16.msra.mxu0 0
    %265 = vmatprep.subr.bf16.mxu0 0
    %266 = vmatpush1.bf16.msra.mxu0 0
    %267 = vmatprep.subr.bf16.mxu0 0
    %268 = vmatpush1.bf16.msra.mxu0 0
    %269 = vmatprep.subr.bf16.mxu0 0
    %270 = vmatpush1.bf16.msra.mxu0 0
    %271 = vmatprep.subr.bf16.mxu0 0
    %272 = vmatpush1.bf16.msra.mxu0 0
    %273 = vmatprep.mubr.bf16.mxu0 0
    %274 = vmatmul.mubr.bf16.gmra.mrb[0].mxu0 %v159
    %v275 = vpop.f32.mrb[0].mxu0
    %v276 = vadd.f32 %v148, %v275
    %v277 = vpop.f32.mrb[0].mxu0
    %v278 = vadd.f32 %v152, %v277
    %v279 = vpop.f32.mrb[0].mxu0
    %v280 = vadd.f32 %v148, %v279
    %v281 = vpop.f32.mrb[0].mxu0
    %v282 = vadd.f32 %v152, %v281
    %283 = vdwg.mxu0
    %284 = vadd.xlane.f32.xlu0 %v276
    %v285 = vpop.xlane.xlu0 %284
    %286 = vadd.xlane.f32.xlu0 %v280
    %v287 = vpop.xlane.xlu0 %286
    %v288 = vmul.f32 %v285, 0.0625
    %v289 = vmul.f32 %v287, 0.0625
    %v290 = vmul.f32 %v276, %v276
    %v291 = vmul.f32 %v280, %v280
    %292 = vadd.xlane.f32.xlu0 %v290
    %v293 = vpop.xlane.xlu0 %292
    %294 = vadd.xlane.f32.xlu0 %v291
    %v295 = vpop.xlane.xlu0 %294
    %v296 = vmul.f32 %v293, 0.0625
    %v297 = vmul.f32 %v295, 0.0625
    %v298 = vmul.f32 %v288, %v288
    %v299 = vmul.f32 %v289, %v289
    %v300 = vsub.f32 %v296, %v298
    %v301 = vsub.f32 %v297, %v299
    %v302 = vsub.f32 %v276, %v288
    %v303 = vsub.f32 %v280, %v289
    %v304 = vadd.f32 %v300, 1e-05
    %v305 = vadd.f32 %v301, 1e-05
    %v306 = vrsqrt.pop %v304
    %v307 = vrsqrt.pop %v305
    %v308 = vmul.f32 %v302, %v306
    %v309 = vmul.f32 %v303, %v307
    %v310 = vmax.f32 %v308, 0.0
    %v311 = vmax.f32 %v309, 0.0
    %312 = vadd.xlane.f32.xlu0 %v278
    %v313 = vpop.xlane.xlu0 %312
    %314 = vadd.xlane.f32.xlu0 %v282
    %v315 = vpop.xlane.xlu0 %314
    %v316 = vmul.f32 %v313, 0.0625
    %v317 = vmul.f32 %v315, 0.0625
    %v318 = vmul.f32 %v278, %v278
    %v319 = vmul.f32 %v282, %v282
    %320 = vadd.xlane.f32.xlu0 %v318
    %v321 = vpop.xlane.xlu0 %320
    %322 = vadd.xlane.f32.xlu0 %v319
    %v323 = vpop.xlane.xlu0 %322
    %v324 = vmul.f32 %v321, 0.0625
    %v325 = vmul.f32 %v323, 0.0625
    %v326 = vmul.f32 %v316, %v316
    %v327 = vmul.f32 %v317, %v317
    %v328 = vsub.f32 %v324, %v326
    %v329 = vsub.f32 %v325, %v327
    %v330 = vsub.f32 %v278, %v316
    %v331 = vsub.f32 %v282, %v317
    %v332 = vadd.f32 %v328, 1e-05
    %v333 = vadd.f32 %v329, 1e-05
    %v334 = vrsqrt.pop %v332
    %v335 = vrsqrt.pop %v333
    %v336 = vmul.f32 %v330, %v334
    %v337 = vmul.f32 %v331, %v335
    %v338 = vmax.f32 %v336, 0.0
    %v339 = vmax.f32 %v337, 0.0
    %v340 = vmul.f32 %v338, 1.442695
    %v341 = vpow.pop %v340
    %v342 = vmul.f32 %v339, 1.442695
    %v343 = vpow.pop %v342
    %v344 = vadd.f32 %v341, 0.0001
    %v345 = vadd.f32 %v343, 0.0001
    %v346 = vrsqrt.pop %v344
    %v347 = vmul.f32 %v344, %v346
    %vm348 = vcmp.eq.f32.partialorder %v344, inf
    %v349 = vsel %vm348, %v344, %v347
    %vm350 = vcmp.eq.f32.partialorder %v344, 0.0
    %v351 = vand.u32 %v344, 2147483648
    %v352 = vsel %vm350, %v351, %v349
    %v353 = vrsqrt.pop %v345
    %v354 = vmul.f32 %v345, %v353
    %vm355 = vcmp.eq.f32.partialorder %v345, inf
    %v356 = vsel %vm355, %v345, %v354
    %vm357 = vcmp.eq.f32.partialorder %v345, 0.0
    %v358 = vand.u32 %v345, 2147483648
    %v359 = vsel %vm357, %v358, %v356
    %v360 = vld [vmem:[#allocation5] sm:$0xf]
    %v361 = vld [vmem:[#allocation5 + $0x4] sm:$0xf]
    %v362 = vunpack.c.l.bf16 %v360
    %v363 = vunpack.c.l.bf16 %v361
    %v364 = vmul.f32 %v352, %v362
    %v365 = vmul.f32 %v359, %v363
    %v366 = vadd.f32 %v310, %v364
    %v367 = vadd.f32 %v311, %v365
    %v368 = vpack.c.bf16 %v367, %v366
    %v369 = vld [vmem:[#allocation8] sm:$0xf]
    %v370 = vld [vmem:[#allocation8 + $0x4] sm:$0xf]
    %v371 = vld [vmem:[#allocation8 + $0x8] sm:$0xf]
    %v372 = vld [vmem:[#allocation8 + $0xc] sm:$0xf]
    %v373 = vld [vmem:[#allocation8 + $0x10] sm:$0xf]
    %v374 = vld [vmem:[#allocation8 + $0x14] sm:$0xf]
    %v375 = vld [vmem:[#allocation8 + $0x18] sm:$0xf]
    %v376 = vld [vmem:[#allocation8 + $0x1c] sm:$0xf]
    %v377 = vld [vmem:[#allocation8 + $0x20] sm:$0xf]
    %v378 = vld [vmem:[#allocation8 + $0x24] sm:$0xf]
    %v379 = vld [vmem:[#allocation8 + $0x28] sm:$0xf]
    %v380 = vld [vmem:[#allocation8 + $0x2c] sm:$0xf]
    %v381 = vld [vmem:[#allocation8 + $0x30] sm:$0xf]
    %v382 = vld [vmem:[#allocation8 + $0x34] sm:$0xf]
    %v383 = vld [vmem:[#allocation8 + $0x38] sm:$0xf]
    %v384 = vld [vmem:[#allocation8 + $0x3c] sm:$0xf]
    %v385 = vld [vmem:[%s5] sm:$0x1]
    %v387 = vlaneseq
    %v388 = vshrl.u32 %v387, 7
    %v389 = vsub.s32 0, %v388
    %v390 = vrot.slane %v385, %v389
    %v408 = vunpack.c.l.b16 %v369
    %v409 = vunpack.c.l.b16 %v370
    %v410 = vunpack.c.l.b16 %v371
    %v411 = vunpack.c.l.b16 %v372
    %v412 = vunpack.c.l.b16 %v373
    %v413 = vunpack.c.l.b16 %v374
    %v414 = vunpack.c.l.b16 %v375
    %v415 = vunpack.c.l.b16 %v376
    %v416 = vunpack.c.l.b16 %v377
    %v417 = vunpack.c.l.b16 %v378
    %v418 = vunpack.c.l.b16 %v379
    %v419 = vunpack.c.l.b16 %v380
    %v420 = vunpack.c.l.b16 %v381
    %v421 = vunpack.c.l.b16 %v382
    %v422 = vunpack.c.l.b16 %v383
    %v423 = vunpack.c.l.b16 %v384
    %v424 = vpack.c.b16 %v409, %v408
    %v425 = vpack.c.b16 %v411, %v410
    %v426 = vpack.c.b16 %v413, %v412
    %v427 = vpack.c.b16 %v415, %v414
    %v428 = vpack.c.b16 %v417, %v416
    %v429 = vpack.c.b16 %v419, %v418
    %v430 = vpack.c.b16 %v421, %v420
    %v431 = vpack.c.b16 %v423, %v422
    %440 = vmatprep.subr.bf16.mxu0 0
    %441 = vmatpush1.bf16.msra.mxu0 %v424
    %442 = vmatprep.subr.bf16.mxu0 0
    %443 = vmatpush1.bf16.msra.mxu0 %v425
    %444 = vmatprep.subr.bf16.mxu0 0
    %445 = vmatpush1.bf16.msra.mxu0 %v426
    %446 = vmatprep.subr.bf16.mxu0 0
    %447 = vmatpush1.bf16.msra.mxu0 %v427
    %448 = vmatprep.subr.bf16.mxu0 0
    %449 = vmatpush1.bf16.msra.mxu0 %v428
    %450 = vmatprep.subr.bf16.mxu0 0
    %451 = vmatpush1.bf16.msra.mxu0 %v429
    %452 = vmatprep.subr.bf16.mxu0 0
    %453 = vmatpush1.bf16.msra.mxu0 %v430
    %454 = vmatprep.subr.bf16.mxu0 0
    %455 = vmatpush1.bf16.msra.mxu0 %v431
    %456 = vmatprep.subr.bf16.mxu0 0
    %457 = vmatpush1.bf16.msra.mxu0 0
    %458 = vmatprep.subr.bf16.mxu0 0
    %459 = vmatpush1.bf16.msra.mxu0 0
    %460 = vmatprep.subr.bf16.mxu0 0
    %461 = vmatpush1.bf16.msra.mxu0 0
    %462 = vmatprep.subr.bf16.mxu0 0
    %463 = vmatpush1.bf16.msra.mxu0 0
    %464 = vmatprep.subr.bf16.mxu0 0
    %465 = vmatpush1.bf16.msra.mxu0 0
    %466 = vmatprep.subr.bf16.mxu0 0
    %467 = vmatpush1.bf16.msra.mxu0 0
    %468 = vmatprep.subr.bf16.mxu0 0
    %469 = vmatpush1.bf16.msra.mxu0 0
    %470 = vmatprep.subr.bf16.mxu0 0
    %471 = vmatpush1.bf16.msra.mxu0 0
    %472 = vmatprep.mubr.bf16.mxu0 0
    %473 = vmatmul.mubr.bf16.gmra.mrb[0].mxu0 %v368
    %v474 = vpop.f32.mrb[0].mxu0
    %v475 = vadd.f32 %v390, %v474
    %v476 = vpop.f32.mrb[0].mxu0
    %v477 = vpop.f32.mrb[0].mxu0
    %v478 = vadd.f32 %v390, %v477
    %v479 = vpop.f32.mrb[0].mxu0
    %480 = vdwg.mxu0
    %481 = vadd.xlane.f32.xlu0 %v475
    %v482 = vpop.xlane.xlu0 %481
    %483 = vadd.xlane.f32.xlu0 %v478
    %v484 = vpop.xlane.xlu0 %483
    %v485 = vmul.f32 %v482, 0.03125
    %v486 = vmul.f32 %v484, 0.03125
    %v487 = vmul.f32 %v475, %v475
    %v488 = vmul.f32 %v478, %v478
    %489 = vadd.xlane.f32.xlu0 %v487
    %v490 = vpop.xlane.xlu0 %489
    %491 = vadd.xlane.f32.xlu0 %v488
    %v492 = vpop.xlane.xlu0 %491
    %v493 = vmul.f32 %v490, 0.03125
    %v494 = vmul.f32 %v492, 0.03125
    %v495 = vmul.f32 %v485, %v485
    %v496 = vmul.f32 %v486, %v486
    %v497 = vsub.f32 %v493, %v495
    %v498 = vsub.f32 %v494, %v496
    %v499 = vsub.f32 %v475, %v485
    %v500 = vsub.f32 %v478, %v486
    %v501 = vadd.f32 %v497, 1e-05
    %v502 = vadd.f32 %v498, 1e-05
    %v503 = vrsqrt.pop %v501
    %v504 = vrsqrt.pop %v502
    %v505 = vmul.f32 %v499, %v503
    %v506 = vmul.f32 %v500, %v504
    %v507 = vmax.f32 %v505, 0.0
    %v508 = vmax.f32 %v506, 0.0
    %v509 = vpack.c.bf16 %v508, %v507
    %v510 = vld [vmem:[#allocation10] sm:$0xf]
    %v511 = vld [vmem:[#allocation10 + $0x4] sm:$0xf]
    %v512 = vld [vmem:[#allocation10 + $0x8] sm:$0xf]
    %v513 = vld [vmem:[#allocation10 + $0xc] sm:$0xf]
    %v514 = vld [vmem:[#allocation10 + $0x10] sm:$0xf]
    %v515 = vld [vmem:[#allocation10 + $0x14] sm:$0xf]
    %v516 = vld [vmem:[#allocation10 + $0x18] sm:$0xf]
    %v517 = vld [vmem:[#allocation10 + $0x1c] sm:$0xf]
    %v518 = vld [vmem:[#allocation10 + $0x20] sm:$0xf]
    %v519 = vld [vmem:[#allocation10 + $0x24] sm:$0xf]
    %v520 = vld [vmem:[#allocation10 + $0x28] sm:$0xf]
    %v521 = vld [vmem:[#allocation10 + $0x2c] sm:$0xf]
    %v522 = vld [vmem:[#allocation10 + $0x30] sm:$0xf]
    %v523 = vld [vmem:[#allocation10 + $0x34] sm:$0xf]
    %v524 = vld [vmem:[#allocation10 + $0x38] sm:$0xf]
    %v525 = vld [vmem:[#allocation10 + $0x3c] sm:$0xf]
    %v526 = vld [vmem:[%s7] sm:$0x1]
    %v528 = vlaneseq
    %v529 = vshrl.u32 %v528, 7
    %v530 = vsub.s32 0, %v529
    %v531 = vrot.slane %v526, %v530
    %v549 = vunpack.c.l.b16 %v510
    %v550 = vunpack.c.l.b16 %v511
    %v551 = vunpack.c.l.b16 %v512
    %v552 = vunpack.c.l.b16 %v513
    %v553 = vunpack.c.l.b16 %v514
    %v554 = vunpack.c.l.b16 %v515
    %v555 = vunpack.c.l.b16 %v516
    %v556 = vunpack.c.l.b16 %v517
    %v557 = vunpack.c.l.b16 %v518
    %v558 = vunpack.c.l.b16 %v519
    %v559 = vunpack.c.l.b16 %v520
    %v560 = vunpack.c.l.b16 %v521
    %v561 = vunpack.c.l.b16 %v522
    %v562 = vunpack.c.l.b16 %v523
    %v563 = vunpack.c.l.b16 %v524
    %v564 = vunpack.c.l.b16 %v525
    %v565 = vpack.c.b16 %v550, %v549
    %v566 = vpack.c.b16 %v552, %v551
    %v567 = vpack.c.b16 %v554, %v553
    %v568 = vpack.c.b16 %v556, %v555
    %v569 = vpack.c.b16 %v558, %v557
    %v570 = vpack.c.b16 %v560, %v559
    %v571 = vpack.c.b16 %v562, %v561
    %v572 = vpack.c.b16 %v564, %v563
    %581 = vmatprep.subr.bf16.mxu0 0
    %582 = vmatpush1.bf16.msra.mxu0 %v565
    %583 = vmatprep.subr.bf16.mxu0 0
    %584 = vmatpush1.bf16.msra.mxu0 %v566
    %585 = vmatprep.subr.bf16.mxu0 0
    %586 = vmatpush1.bf16.msra.mxu0 %v567
    %587 = vmatprep.subr.bf16.mxu0 0
    %588 = vmatpush1.bf16.msra.mxu0 %v568
    %589 = vmatprep.subr.bf16.mxu0 0
    %590 = vmatpush1.bf16.msra.mxu0 %v569
    %591 = vmatprep.subr.bf16.mxu0 0
    %592 = vmatpush1.bf16.msra.mxu0 %v570
    %593 = vmatprep.subr.bf16.mxu0 0
    %594 = vmatpush1.bf16.msra.mxu0 %v571
    %595 = vmatprep.subr.bf16.mxu0 0
    %596 = vmatpush1.bf16.msra.mxu0 %v572
    %597 = vmatprep.subr.bf16.mxu0 0
    %598 = vmatpush1.bf16.msra.mxu0 0
    %599 = vmatprep.subr.bf16.mxu0 0
    %600 = vmatpush1.bf16.msra.mxu0 0
    %601 = vmatprep.subr.bf16.mxu0 0
    %602 = vmatpush1.bf16.msra.mxu0 0
    %603 = vmatprep.subr.bf16.mxu0 0
    %604 = vmatpush1.bf16.msra.mxu0 0
    %605 = vmatprep.subr.bf16.mxu0 0
    %606 = vmatpush1.bf16.msra.mxu0 0
    %607 = vmatprep.subr.bf16.mxu0 0
    %608 = vmatpush1.bf16.msra.mxu0 0
    %609 = vmatprep.subr.bf16.mxu0 0
    %610 = vmatpush1.bf16.msra.mxu0 0
    %611 = vmatprep.subr.bf16.mxu0 0
    %612 = vmatpush1.bf16.msra.mxu0 0
    %613 = vmatprep.mubr.bf16.mxu0 0
    %614 = vmatmul.mubr.bf16.gmra.mrb[0].mxu0 %v509
    %v615 = vpop.f32.mrb[0].mxu0
    %v616 = vadd.f32 %v531, %v615
    %v617 = vpop.f32.mrb[0].mxu0
    %v618 = vpop.f32.mrb[0].mxu0
    %v619 = vadd.f32 %v531, %v618
    %v620 = vpop.f32.mrb[0].mxu0
    %621 = vdwg.mxu0
    %622 = vadd.xlane.f32.xlu0 %v616
    %v623 = vpop.xlane.xlu0 %622
    %624 = vadd.xlane.f32.xlu0 %v619
    %v625 = vpop.xlane.xlu0 %624
    %v626 = vmul.f32 %v623, 0.03125
    %v627 = vmul.f32 %v625, 0.03125
    %v628 = vmul.f32 %v616, %v616
    %v629 = vmul.f32 %v619, %v619
    %630 = vadd.xlane.f32.xlu0 %v628
    %v631 = vpop.xlane.xlu0 %630
    %632 = vadd.xlane.f32.xlu0 %v629
    %v633 = vpop.xlane.xlu0 %632
    %v634 = vmul.f32 %v631, 0.03125
    %v635 = vmul.f32 %v633, 0.03125
    %v636 = vmul.f32 %v626, %v626
    %v637 = vmul.f32 %v627, %v627
    %v638 = vsub.f32 %v634, %v636
    %v639 = vsub.f32 %v635, %v637
    %v640 = vsub.f32 %v616, %v626
    %v641 = vsub.f32 %v619, %v627
    %v642 = vadd.f32 %v638, 1e-05
    %v643 = vadd.f32 %v639, 1e-05
    %v644 = vrsqrt.pop %v642
    %v645 = vrsqrt.pop %v643
    %v646 = vmul.f32 %v640, %v644
    %v647 = vmul.f32 %v641, %v645
    %v648 = vmax.f32 %v646, 0.0
    %v649 = vmax.f32 %v647, 0.0
    %v650 = vpack.c.bf16 %v649, %v648
    %v651 = vld [vmem:[#allocation11] sm:$0xf]
    %v652 = vld [vmem:[#allocation11 + $0x4] sm:$0xf]
    %v653 = vld [vmem:[#allocation11 + $0x8] sm:$0xf]
    %v654 = vld [vmem:[#allocation11 + $0xc] sm:$0xf]
    %v655 = vld [vmem:[#allocation11 + $0x10] sm:$0xf]
    %v656 = vld [vmem:[#allocation11 + $0x14] sm:$0xf]
    %v657 = vld [vmem:[#allocation11 + $0x18] sm:$0xf]
    %v658 = vld [vmem:[#allocation11 + $0x1c] sm:$0xf]
    %v659 = vld [vmem:[#allocation11 + $0x20] sm:$0xf]
    %v660 = vld [vmem:[#allocation11 + $0x24] sm:$0xf]
    %v661 = vld [vmem:[#allocation11 + $0x28] sm:$0xf]
    %v662 = vld [vmem:[#allocation11 + $0x2c] sm:$0xf]
    %v663 = vld [vmem:[#allocation11 + $0x30] sm:$0xf]
    %v664 = vld [vmem:[#allocation11 + $0x34] sm:$0xf]
    %v665 = vld [vmem:[#allocation11 + $0x38] sm:$0xf]
    %v666 = vld [vmem:[#allocation11 + $0x3c] sm:$0xf]
    %v667 = vld [vmem:[%s9] sm:$0x1]
    %v669 = vlaneseq
    %v670 = vshrl.u32 %v669, 7
    %v671 = vsub.s32 0, %v670
    %v672 = vrot.slane %v667, %v671
    %v690 = vunpack.c.l.b16 %v651
    %v691 = vunpack.c.l.b16 %v652
    %v692 = vunpack.c.l.b16 %v653
    %v693 = vunpack.c.l.b16 %v654
    %v694 = vunpack.c.l.b16 %v655
    %v695 = vunpack.c.l.b16 %v656
    %v696 = vunpack.c.l.b16 %v657
    %v697 = vunpack.c.l.b16 %v658
    %v698 = vunpack.c.l.b16 %v659
    %v699 = vunpack.c.l.b16 %v660
    %v700 = vunpack.c.l.b16 %v661
    %v701 = vunpack.c.l.b16 %v662
    %v702 = vunpack.c.l.b16 %v663
    %v703 = vunpack.c.l.b16 %v664
    %v704 = vunpack.c.l.b16 %v665
    %v705 = vunpack.c.l.b16 %v666
    %v706 = vpack.c.b16 %v691, %v690
    %v707 = vpack.c.b16 %v693, %v692
    %v708 = vpack.c.b16 %v695, %v694
    %v709 = vpack.c.b16 %v697, %v696
    %v710 = vpack.c.b16 %v699, %v698
    %v711 = vpack.c.b16 %v701, %v700
    %v712 = vpack.c.b16 %v703, %v702
    %v713 = vpack.c.b16 %v705, %v704
    %722 = vmatprep.subr.bf16.mxu0 0
    %723 = vmatpush1.bf16.msra.mxu0 %v706
    %724 = vmatprep.subr.bf16.mxu0 0
    %725 = vmatpush1.bf16.msra.mxu0 %v707
    %726 = vmatprep.subr.bf16.mxu0 0
    %727 = vmatpush1.bf16.msra.mxu0 %v708
    %728 = vmatprep.subr.bf16.mxu0 0
    %729 = vmatpush1.bf16.msra.mxu0 %v709
    %730 = vmatprep.subr.bf16.mxu0 0
    %731 = vmatpush1.bf16.msra.mxu0 %v710
    %732 = vmatprep.subr.bf16.mxu0 0
    %733 = vmatpush1.bf16.msra.mxu0 %v711
    %734 = vmatprep.subr.bf16.mxu0 0
    %735 = vmatpush1.bf16.msra.mxu0 %v712
    %736 = vmatprep.subr.bf16.mxu0 0
    %737 = vmatpush1.bf16.msra.mxu0 %v713
    %738 = vmatprep.subr.bf16.mxu0 0
    %739 = vmatpush1.bf16.msra.mxu0 0
    %740 = vmatprep.subr.bf16.mxu0 0
    %741 = vmatpush1.bf16.msra.mxu0 0
    %742 = vmatprep.subr.bf16.mxu0 0
    %743 = vmatpush1.bf16.msra.mxu0 0
    %744 = vmatprep.subr.bf16.mxu0 0
    %745 = vmatpush1.bf16.msra.mxu0 0
    %746 = vmatprep.subr.bf16.mxu0 0
    %747 = vmatpush1.bf16.msra.mxu0 0
    %748 = vmatprep.subr.bf16.mxu0 0
    %749 = vmatpush1.bf16.msra.mxu0 0
    %750 = vmatprep.subr.bf16.mxu0 0
    %751 = vmatpush1.bf16.msra.mxu0 0
    %752 = vmatprep.subr.bf16.mxu0 0
    %753 = vmatpush1.bf16.msra.mxu0 0
    %754 = vmatprep.mubr.bf16.mxu0 0
    %755 = vmatmul.mubr.bf16.gmra.mrb[0].mxu0 %v650
    %v756 = vpop.f32.mrb[0].mxu0
    %v757 = vadd.f32 %v672, %v756
    %v758 = vpop.f32.mrb[0].mxu0
    %v759 = vpop.f32.mrb[0].mxu0
    %v760 = vadd.f32 %v672, %v759
    %v761 = vpop.f32.mrb[0].mxu0
    %762 = vdwg.mxu0
    %763 = vst [vmem:[#allocation13] sm:$0xff] %v757
    %764 = vst [vmem:[#allocation13 + $0x8] sm:$0xff] %v760
    %v766 = vunpack.c.l.b16 %v368
    %v767 = vunpack.c.h.b16 %v368
    %v768 = vpack.c.b16 %v766, %v766
    %v769 = vpack.c.b16 %v767, %v767
    %772 = vst [vmem:[#allocation14] sm:$0xf] %v768
    %773 = vst [vmem:[#allocation14 + $0x4] sm:$0xf] %v769
    %v774 = vpack.c.bf16 %v311, %v310
    %v776 = vunpack.c.l.b16 %v774
    %v777 = vunpack.c.h.b16 %v774
    %v778 = vpack.c.b16 %v776, %v776
    %v779 = vpack.c.b16 %v777, %v777
    %782 = vst [vmem:[#allocation16] sm:$0xf] %v778
    %783 = vst [vmem:[#allocation16 + $0x4] sm:$0xf] %v779
    %v784 = vpack.c.bf16 %v359, %v352
    %v786 = vunpack.c.l.b16 %v784
    %v787 = vunpack.c.h.b16 %v784
    %v788 = vpack.c.b16 %v786, %v786
    %v789 = vpack.c.b16 %v787, %v787
    %792 = vst [vmem:[#allocation17] sm:$0xf] %v788
    %793 = vst [vmem:[#allocation17 + $0x4] sm:$0xf] %v789
    // Predicated region
    $region66: #{tpu_custom_call.1} parent=1 // pred_check
      _
    $region67: #{tpu_custom_call.1} parent=1 // pred_check_branch
      %795 = sbr.rel (0) target = $region69
    $region68: #{tpu_custom_call.1} parent=1 // pred_region
      %s797 = ssub.s32 256, 256
      %798 = vsyncadd [#allocation4], %s797
      %s799 = sshll.u32 [#allocation13], 4
      %s800 = int_to_ptr.vmem [resolvable:$true] %s799
      %805 = dma.vmem_to_hbm [thread:$0]  %s800, 256, %s10, [#allocation4], 128, 128, 8
    $region69: #{tpu_custom_call.1} parent=1 // pred_fallthru
      _
    // Predicated region
    $region70: #{tpu_custom_call.1} parent=1 // pred_check
      _
    $region71: #{tpu_custom_call.1} parent=1 // pred_check_branch
      %807 = sbr.rel (0) target = $region73
    $region72: #{tpu_custom_call.1} parent=1 // pred_region
      %s809 = ssub.s32 128, 128
      %810 = vsyncadd [#allocation15], %s809
      %s811 = sshll.u32 [#allocation14], 4
      %s812 = int_to_ptr.vmem [resolvable:$true] %s811
      %817 = dma.vmem_to_hbm [thread:$0]  %s812, 128, %s11, [#allocation15], 64, 64, 4
    $region73: #{tpu_custom_call.1} parent=1 // pred_fallthru
      _
    // Predicated region
    $region74: #{tpu_custom_call.1} parent=1 // pred_check
      _
    $region75: #{tpu_custom_call.1} parent=1 // pred_check_branch
      %819 = sbr.rel (0) target = $region77
    $region76: #{tpu_custom_call.1} parent=1 // pred_region
      %s821 = ssub.s32 128, 128
      %822 = vsyncadd [#allocation15], %s821
      %s823 = sshll.u32 [#allocation16], 4
      %s824 = int_to_ptr.vmem [resolvable:$true] %s823
      %829 = dma.vmem_to_hbm [thread:$0]  %s824, 128, %s12, [#allocation15], 64, 64, 4
    $region77: #{tpu_custom_call.1} parent=1 // pred_fallthru
      _
    // Predicated region
    $region78: #{tpu_custom_call.1} parent=1 // pred_check
      _
    $region79: #{tpu_custom_call.1} parent=1 // pred_check_branch
      %831 = sbr.rel (0) target = $region81
    $region80: #{tpu_custom_call.1} parent=1 // pred_region
      %s833 = ssub.s32 128, 128
      %834 = vsyncadd [#allocation18], %s833
      %s835 = sshll.u32 [#allocation17], 4
      %s836 = int_to_ptr.vmem [resolvable:$true] %s835
      %841 = dma.vmem_to_hbm [thread:$0]  %s836, 128, %s13, [#allocation18], 64, 64, 4
    $region81: #{tpu_custom_call.1} parent=1 // pred_fallthru
      _
    // Predicated region
    $region82: #{tpu_custom_call.1} parent=1 // pred_check
      _
    $region83: #{tpu_custom_call.1} parent=1 // pred_check_branch
      %843 = sbr.rel (0) target = $region85
    $region84: #{tpu_custom_call.1} parent=1 // pred_region
      %844 = dma.done [#allocation4], 256
    $region85: #{tpu_custom_call.1} parent=1 // pred_fallthru
      _
    // Predicated region
    $region86: #{tpu_custom_call.1} parent=1 // pred_check
      _
    $region87: #{tpu_custom_call.1} parent=1 // pred_check_branch
      %846 = sbr.rel (0) target = $region89
    $region88: #{tpu_custom_call.1} parent=1 // pred_region
      %847 = dma.done [#allocation15], 128
    $region89: #{tpu_custom_call.1} parent=1 // pred_fallthru
      _
    // Predicated region
    $region90: #{tpu_custom_call.1} parent=1 // pred_check
      _
    $region91: #{tpu_custom_call.1} parent=1 // pred_check_branch
      %849 = sbr.rel (0) target = $region93
    $region92: #{tpu_custom_call.1} parent=1 // pred_region
      %850 = dma.done [#allocation15], 128
    $region93: #{tpu_custom_call.1} parent=1 // pred_fallthru
      _
    // Predicated region
    $region94: #{tpu_custom_call.1} parent=1 // pred_check
      _
    $region95: #{tpu_custom_call.1} parent=1 // pred_check_branch
      %852 = sbr.rel (0) target = $region97
    $region96: #{tpu_custom_call.1} parent=1 // pred_region
      %853 = dma.done [#allocation18], 128
    $region97: #{tpu_custom_call.1} parent=1 // pred_fallthru
      _
    %854 = vsyncpa [#allocation3], 1
    %855 = vsyncpa [#allocation6], 1
    %856 = vsyncpa [#allocation9], 1
    %857 = vsyncpa [#allocation12], 1
    %858 = vsyncpa [#allocation4], 1
    %859 = vsyncpa [#allocation15], 1
    %860 = vsyncpa [#allocation18], 1

</llo_original>
